<compile_context>
chip_gen: v5e
topology: v5e:2x2
jax: 0.10.0
libtpu: 0.0.40
codegen_flags: <defaults>
</compile_context>

<pallas_src>
import functools

import jax
import jax.numpy as jnp
from jax import lax
from jax.experimental import pallas as pl
from jax.experimental.pallas import tpu as pltpu

EPS = 1e-5


# ----------------------------------------------------------------------------
# In-kernel helpers.  All tiles are (C, HW): channels on sublanes, flattened
# spatial on lanes.  Everything below runs in f32 regardless of the I/O dtype.
# ----------------------------------------------------------------------------
def _in_prelu(y, gamma, beta, alpha):
    """InstanceNorm (biased var, one-pass stats, clamped) + affine + PReLU on (C, L)."""
    inv_l = 1.0 / y.shape[1]
    mean = jnp.sum(y, axis=1, keepdims=True) * inv_l                 # (C, 1)
    var = jnp.sum(y * y, axis=1, keepdims=True) * inv_l - mean * mean
    var = jnp.maximum(var, 0.0)                                      # f32 cancellation guard
    yn = (y - mean) * lax.rsqrt(var + EPS) * gamma + beta
    return jnp.where(yn >= 0, yn, alpha * yn)


def _make_tap_masks(H, W):
    """9 per-lane validity masks for the 3x3 pad=1 taps, hoisted out of the tap loop.

    Row validity needs no integer division: h >= 1  <=>  pos >= W,
    h <= H-2  <=>  pos < H*W - W.  Column validity uses pos % W."""
    hw = H * W
    pos = lax.broadcasted_iota(jnp.int32, (1, hw), 1)
    w_idx = pos % W
    row = [pos >= W, None, pos < hw - W]          # dy = 0, 1, 2  (source row in range)
    col = [w_idx >= 1, None, w_idx <= W - 2]      # dx = 0, 1, 2  (source col in range)
    masks = []
    for k in range(9):
        dy, dx = divmod(k, 3)
        r, c = row[dy], col[dx]
        if r is None:
            masks.append(c)
        elif c is None:
            masks.append(r)
        else:
            masks.append(jnp.logical_and(r, c))
    return masks


def _conv2_stage(x_mid, w2_all, g2, b2, a2, masks, H, W):
    """3x3 conv (pad=1) as 9 rolled-tap matmuls accumulated in f32, then IN + PReLU.

    tap_k[:, l] = x_mid[:, l + off_k] for valid lanes, 0 for pad lanes.  The circular
    wrap of the roll only lands on lanes the mask zeroes, so roll + select is exact."""
    hw = H * W
    acc = None
    for k in range(9):
        dy, dx = divmod(k, 3)
        off = (dy - 1) * W + (dx - 1)             # source lane = dest lane + off
        tap = x_mid if off == 0 else jnp.roll(x_mid, (-off) % hw, axis=1)
        if masks[k] is not None:
            tap = jnp.where(masks[k], tap, 0.0)
        part = jnp.dot(w2_all[k], tap, preferred_element_type=jnp.float32)  # (Cout, HW)
        acc = part if acc is None else acc + part
    return _in_prelu(acc, g2, b2, a2)


# ----------------------------------------------------------------------------
# Fused per-block kernels (with / without attention fusion).  Each grid step
# handles a block of Nb samples (static unroll); the mid activation never
# leaves VMEM.
# ----------------------------------------------------------------------------
def _abf_kernel(x_ref, w1_ref, g1_ref, b1_ref, a1_ref,
                w2_ref, g2_ref, b2_ref, a2_ref,
                y_out_ref, x_out_ref, *, H, W):
    masks = _make_tap_masks(H, W)
    w1, g1, b1, a1 = w1_ref[...], g1_ref[...], b1_ref[...], a1_ref[...]
    w2, g2, b2, a2 = w2_ref[...], g2_ref[...], b2_ref[...], a2_ref[...]
    for n in range(x_ref.shape[0]):                                   # static unroll
        x = x_ref[n].astype(jnp.float32)                              # (Cin, HW)
        x_mid = _in_prelu(jnp.dot(w1, x, preferred_element_type=jnp.float32),
                          g1, b1, a1)                                 # (Cmid, HW)
        x_out_ref[n] = x_mid.astype(x_out_ref.dtype)
        y_out_ref[n] = _conv2_stage(x_mid, w2, g2, b2, a2, masks, H, W
                                    ).astype(y_out_ref.dtype)


def _abf_fuse_kernel(x_ref, y_ref, s_ref, w1_ref, g1_ref, b1_ref, a1_ref,
                     wa_ref, ba_ref, w2_ref, g2_ref, b2_ref, a2_ref,
                     y_out_ref, x_out_ref, *, H, W):
    masks = _make_tap_masks(H, W)
    s_up = s_ref[...]                                                 # (Hy*Wy, HW) 0/1
    w1, g1, b1, a1 = w1_ref[...], g1_ref[...], b1_ref[...], a1_ref[...]
    wa, ba = wa_ref[...], ba_ref[...]
    w2, g2, b2, a2 = w2_ref[...], g2_ref[...], b2_ref[...], a2_ref[...]
    c = w1.shape[0]                                                   # Cmid
    wa_x, wa_y = wa[:, :c], wa[:, c:]                                 # (2, Cmid) each
    for n in range(x_ref.shape[0]):                                   # static unroll
        x = x_ref[n].astype(jnp.float32)
        x_mid = _in_prelu(jnp.dot(w1, x, preferred_element_type=jnp.float32),
                          g1, b1, a1)                                 # (Cmid, HW)
        # fused nearest upsample: (Cmid, Hy*Wy) @ (Hy*Wy, HW) on the (idle) MXU
        y_up = jnp.dot(y_ref[n].astype(jnp.float32), s_up,
                       preferred_element_type=jnp.float32)            # (Cmid, HW)
        # both attention logits in one pass; sigmoid goes to the EUP slot
        logits = (jnp.dot(wa_x, x_mid, preferred_element_type=jnp.float32)
                  + jnp.dot(wa_y, y_up, preferred_element_type=jnp.float32)
                  + ba)                                               # (2, HW)
        att = jax.nn.sigmoid(logits)
        x_mid = x_mid * att[0:1, :] + y_up * att[1:2, :]
        x_out_ref[n] = x_mid.astype(x_out_ref.dtype)
        y_out_ref[n] = _conv2_stage(x_mid, w2, g2, b2, a2, masks, H, W
                                    ).astype(y_out_ref.dtype)


# ----------------------------------------------------------------------------
# Host-side wrappers (inputs / outputs in PyTorch NCHW convention).
# ----------------------------------------------------------------------------
def _col(v, c):
    v = jnp.asarray(v, jnp.float32).reshape(-1)
    if v.shape[0] == 1:
        v = jnp.broadcast_to(v, (c,))
    return v.reshape(c, 1)


def _nearest_select_matrix(hy, wy, out_h, out_w):
    """(hy*wy, out_h*out_w) 0/1 matrix so y_up_flat = y_low_flat @ S (exact nearest:
    src = (dst * in) // out, integer arithmetic => matches F.interpolate exactly)."""
    hi = (jnp.arange(out_h, dtype=jnp.int32) * hy) // out_h
    wi = (jnp.arange(out_w, dtype=jnp.int32) * wy) // out_w
    src = (hi[:, None] * wy + wi[None, :]).reshape(1, out_h * out_w)
    rows = jnp.arange(hy * wy, dtype=jnp.int32)[:, None]
    return (rows == src).astype(jnp.float32)


def _pick_batch_block(n, bytes_per_sample, budget_bytes=12 << 20, min_steps=2):
    """Largest divisor of n keeping >= min_steps grid steps (both v7x TCs busy) and
    2x-double-buffered activation blocks under the VMEM budget."""
    best = 1
    for nb in range(1, n + 1):
        if n % nb:
            continue
        if n // nb < min(min_steps, n):
            continue
        if 2 * nb * bytes_per_sample > budget_bytes:
            continue
        best = nb
    return best


def abf_res_forward(x_nchw, y_nchw, shape, params, *, act_dtype=jnp.float32,
                    batch_block=None):
    """ABF_Res.forward(x, y, shape) -> (y_out, x_out), all NCHW."""
    N, Cin, H, W = x_nchw.shape
    HW = H * W
    w1 = jnp.asarray(params["w1"], jnp.float32)                      # (Cmid, Cin)
    Cmid = w1.shape[0]
    w2_hwio = jnp.asarray(params["w2"], jnp.float32)                 # (3, 3, Cmid, Cout)
    Cout = w2_hwio.shape[-1]
    # (9, Cout, Cmid): tap-major so the kernel indexes w2[k] with no lane slicing.
    w2 = jnp.transpose(w2_hwio.reshape(9, Cmid, Cout), (0, 2, 1))

    g1, b1, a1 = _col(params["g1"], Cmid), _col(params["b1"], Cmid), _col(params["a1"], Cmid)
    g2, b2, a2 = _col(params["g2"], Cout), _col(params["b2"], Cout), _col(params["a2"], Cout)

    x_flat = x_nchw.astype(act_dtype).reshape(N, Cin, HW)            # NCHW is already (N,C,HW)
    fuse = y_nchw is not None
    act_bytes = jnp.dtype(act_dtype).itemsize
    per_sample = act_bytes * HW * (Cin + Cmid + Cout)
    if fuse:
        per_sample += act_bytes * Cmid * (y_nchw.shape[2] * y_nchw.shape[3])
    nb = batch_block or _pick_batch_block(N, per_sample)
    assert N % nb == 0
    grid = (N // nb,)

    def rep(bs):  # replicated parameter block: same block index every grid step
        nd = len(bs)
        return pl.BlockSpec(bs, lambda b: (0,) * nd)

    x_spec = pl.BlockSpec((nb, Cin, HW), lambda b: (b, 0, 0))
    out_specs = (pl.BlockSpec((nb, Cout, HW), lambda b: (b, 0, 0)),
                 pl.BlockSpec((nb, Cmid, HW), lambda b: (b, 0, 0)))
    out_shape = (jax.ShapeDtypeStruct((N, Cout, HW), act_dtype),
                 jax.ShapeDtypeStruct((N, Cmid, HW), act_dtype))
    param_specs_1 = [rep((Cmid, Cin)), rep((Cmid, 1)), rep((Cmid, 1)), rep((Cmid, 1))]
    param_specs_2 = [rep((9, Cout, Cmid)), rep((Cout, 1)), rep((Cout, 1)), rep((Cout, 1))]

    if fuse:
        assert shape == W, "torch.cat requires the interpolated width == W"
        Hy, Wy = y_nchw.shape[2], y_nchw.shape[3]
        y_flat = y_nchw.astype(act_dtype).reshape(N, Cmid, Hy * Wy)  # low-res residual
        s_mat = _nearest_select_matrix(Hy, Wy, H, shape)             # (Hy*Wy, HW)
        wa_t = jnp.asarray(params["wa"], jnp.float32).T              # (2, 2*Cmid)
        ba = jnp.asarray(params["ba"], jnp.float32).reshape(2, 1)
        kernel = functools.partial(_abf_fuse_kernel, H=H, W=W)
        in_specs = ([x_spec,
                     pl.BlockSpec((nb, Cmid, Hy * Wy), lambda b: (b, 0, 0)),
                     rep((Hy * Wy, HW))]
                    + param_specs_1
                    + [rep((2, 2 * Cmid)), rep((2, 1))]
                    + param_specs_2)
        args = (x_flat, y_flat, s_mat, w1, g1, b1, a1, wa_t, ba, w2, g2, b2, a2)
    else:
        kernel = functools.partial(_abf_kernel, H=H, W=W)
        in_specs = [x_spec] + param_specs_1 + param_specs_2
        args = (x_flat, w1, g1, b1, a1, w2, g2, b2, a2)

    y_out, x_out = pl.pallas_call(
        kernel,
        out_shape=out_shape,
        grid=grid,
        in_specs=in_specs,
        out_specs=out_specs,
        compiler_params=pltpu.CompilerParams(
            dimension_semantics=("parallel",),       # megacore / v7x 2nd TC
            vmem_limit_bytes=48 * 1024 * 1024),      # > v5e/v6e scoped default, < v7x 64 MiB
    )(*args)
    return y_out.reshape(N, Cout, H, W), x_out.reshape(N, Cmid, H, W)


def res_kd_forward(student_features, shapes, abf_params, abf_fn):
    """ResKD.forward.  abf_params must already be in reversed order (= self.abfs)."""
    x = student_features[::-1]
    results = []
    out, res = abf_fn(x[0], None, None, abf_params[0])
    results.append(out)
    for feat, prm, shp in zip(x[1:], abf_params[1:], shapes[1:]):
        out, res = abf_fn(feat, res, shp, prm)
        results.insert(0, out)
    return results


# ----------------------------------------------------------------------------
# Pure-JAX reference (self-check only)
# ----------------------------------------------------------------------------
def _nearest_resize_nchw(y, out_h, out_w):
    hy, wy = y.shape[2], y.shape[3]
    hi = (jnp.arange(out_h) * hy) // out_h           # exact integer floor(dst*in/out)
    wi = (jnp.arange(out_w) * wy) // out_w
    return y[:, :, hi][:, :, :, wi]


def ref_abf_forward(x, y, shape, params):
    def inorm(t, g, b):
        m = t.mean(axis=(2, 3), keepdims=True)
        v = ((t - m) ** 2).mean(axis=(2, 3), keepdims=True)
        return ((t - m) / jnp.sqrt(v + EPS) * g.reshape(1, -1, 1, 1)
                + b.reshape(1, -1, 1, 1))

    def prelu(t, a):
        return jnp.where(t >= 0, t, a * t)

    w1_oihw = jnp.asarray(params["w1"])[:, :, None, None]
    x1 = lax.conv_general_dilated(x, w1_oihw, (1, 1), "VALID")
    x1 = prelu(inorm(x1, params["g1"], params["b1"]), params["a1"])
    if y is not None:
        H = x.shape[2]
        y_up = _nearest_resize_nchw(y, H, shape)
        z = jnp.concatenate([x1, y_up], axis=1)
        wa_oihw = jnp.asarray(params["wa"]).T[:, :, None, None]
        att = (lax.conv_general_dilated(z, wa_oihw, (1, 1), "VALID")
               + jnp.asarray(params["ba"]).reshape(1, 2, 1, 1))
        att = jax.nn.sigmoid(att)
        x1 = x1 * att[:, 0:1] + y_up * att[:, 1:2]
    w2_oihw = jnp.transpose(jnp.asarray(params["w2"]), (3, 2, 0, 1))
    y2 = lax.conv_general_dilated(x1, w2_oihw, (1, 1), ((1, 1), (1, 1)))
    y2 = prelu(inorm(y2, params["g2"], params["b2"]), params["a2"])
    return y2, x1


# ----------------------------------------------------------------------------
if __name__ == "__main__":
    # Small ResKD: in_channels=[4, 8], out_channels=[8, 8], mid_channel=4.
    # ABF(in=4) -> fuse=True, ABF(in=8) -> fuse=False; self.abfs is reversed.
    # N=4 so the sample-batched grid path (Nb=2, 2 grid steps) is exercised.
    N = 4
    mid_channel = 4
    shapes = [8, 16]                       # ordered to match reversed features

    keys = iter(jax.random.split(jax.random.PRNGKey(0), 20))

    def make_abf_params(in_c, mid_c, out_c, fuse):
        p = dict(
            w1=(0.3 * jax.random.normal(next(keys), (mid_c, in_c))).astype(jnp.float32),
            g1=(1.0 + 0.1 * jax.random.normal(next(keys), (mid_c,))).astype(jnp.float32),
            b1=(0.1 * jax.random.normal(next(keys), (mid_c,))).astype(jnp.float32),
            a1=jnp.float32(0.25),          # nn.PReLU() default single parameter
            wa=None, ba=None,
            w2=(0.2 * jax.random.normal(next(keys), (3, 3, mid_c, out_c))).astype(jnp.float32),
            g2=(1.0 + 0.1 * jax.random.normal(next(keys), (out_c,))).astype(jnp.float32),
            b2=(0.1 * jax.random.normal(next(keys), (out_c,))).astype(jnp.float32),
            a2=jnp.float32(0.25),
        )
        if fuse:
            p["wa"] = (0.3 * jax.random.normal(next(keys), (2 * mid_c, 2))).astype(jnp.float32)
            p["ba"] = (0.1 * jax.random.normal(next(keys), (2,))).astype(jnp.float32)
        return p

    abf_params = [make_abf_params(8, mid_channel, 8, fuse=False),    # abfs[0]
                  make_abf_params(4, mid_channel, 8, fuse=True)]     # abfs[1]

    f_shallow = jax.random.normal(next(keys), (N, 4, 16, 16), jnp.float32)
    f_deep = jax.random.normal(next(keys), (N, 8, 8, 8), jnp.float32)
    student_features = [f_shallow, f_deep]

    refs = res_kd_forward(student_features, shapes, abf_params, ref_abf_forward)

    # --- f32 activation I/O: strict check against the pure-JAX reference. ---
    results = res_kd_forward(student_features, shapes, abf_params, abf_res_forward)
    results = [jax.block_until_ready(r) for r in results]
    assert results[0].shape == (N, 8, 16, 16)
    assert results[1].shape == (N, 8, 8, 8)
    for got, want in zip(results, refs):
        err = float(jnp.max(jnp.abs(got - want)))
        assert jnp.allclose(got, want, atol=5e-3, rtol=5e-3), err

    # --- bf16 activation I/O (halves HBM traffic; stats/accumulation stay f32). ---
    bf16_fn = functools.partial(abf_res_forward, act_dtype=jnp.bfloat16)
    results_bf16 = res_kd_forward(student_features, shapes, abf_params, bf16_fn)
    results_bf16 = [jax.block_until_ready(r) for r in results_bf16]
    for got, want in zip(results_bf16, refs):
        got32 = got.astype(jnp.float32)
        err = float(jnp.max(jnp.abs(got32 - want)))
        assert bool(jnp.all(jnp.isfinite(got32))) and err < 0.35, err

    print("KERNEL_OK")
</pallas_src>

<mosaic_0001>
module attributes {stable_mosaic.version = 11 : i64} {
  func.func @_abf_kernel(%arg0: i32, %arg1: memref<2x8x64xf32, #tpu.memory_space<vmem>>, %arg2: memref<4x8xf32, #tpu.memory_space<vmem>>, %arg3: memref<4x1xf32, #tpu.memory_space<vmem>>, %arg4: memref<4x1xf32, #tpu.memory_space<vmem>>, %arg5: memref<4x1xf32, #tpu.memory_space<vmem>>, %arg6: memref<9x8x4xf32, #tpu.memory_space<vmem>>, %arg7: memref<8x1xf32, #tpu.memory_space<vmem>>, %arg8: memref<8x1xf32, #tpu.memory_space<vmem>>, %arg9: memref<8x1xf32, #tpu.memory_space<vmem>>, %arg10: memref<2x8x64xf32, #tpu.memory_space<vmem>>, %arg11: memref<2x4x64xf32, #tpu.memory_space<vmem>>) attributes {dimension_semantics = [#tpu.dimension_semantics<parallel>], iteration_bounds = array<i64: 2>, scalar_prefetch = 0 : i64, scratch_operands = 0 : i64, tpu.core_type = #tpu.core_type<tc>, window_params = [{transform_indices = @transform_0, window_bounds = array<i64: 2, 8, 64>}, {pipeline_mode = #tpu.pipeline_mode<synchronous>, transform_indices = @transform_1, window_bounds = array<i64: 4, 8>}, {pipeline_mode = #tpu.pipeline_mode<synchronous>, transform_indices = @transform_2, window_bounds = array<i64: 4, 1>}, {pipeline_mode = #tpu.pipeline_mode<synchronous>, transform_indices = @transform_3, window_bounds = array<i64: 4, 1>}, {pipeline_mode = #tpu.pipeline_mode<synchronous>, transform_indices = @transform_4, window_bounds = array<i64: 4, 1>}, {pipeline_mode = #tpu.pipeline_mode<synchronous>, transform_indices = @transform_5, window_bounds = array<i64: 9, 8, 4>}, {pipeline_mode = #tpu.pipeline_mode<synchronous>, transform_indices = @transform_6, window_bounds = array<i64: 8, 1>}, {pipeline_mode = #tpu.pipeline_mode<synchronous>, transform_indices = @transform_7, window_bounds = array<i64: 8, 1>}, {pipeline_mode = #tpu.pipeline_mode<synchronous>, transform_indices = @transform_8, window_bounds = array<i64: 8, 1>}, {transform_indices = @transform_9, window_bounds = array<i64: 2, 8, 64>}, {transform_indices = @transform_10, window_bounds = array<i64: 2, 4, 64>}]} {
    %0 = tpu.iota {dimensions = array<i32: 1>} : vector<1x64xi32>
    %c8_i32 = arith.constant 8 : i32
    %c0_i32 = arith.constant 0 : i32
    %1 = arith.cmpi eq, %c8_i32, %c0_i32 : i32
    %c1_i32 = arith.constant 1 : i32
    %2 = arith.select %1, %c1_i32, %c8_i32 : i32
    %3 = vector.broadcast %2 : i32 to vector<1x64xi32>
    %4 = arith.remsi %0, %3 : vector<1x64xi32>
    %c0_i32_0 = arith.constant 0 : i32
    %5 = vector.broadcast %c0_i32_0 : i32 to vector<1x64xi32>
    %6 = arith.cmpi ne, %4, %5 : vector<1x64xi32>
    %c0_i32_1 = arith.constant 0 : i32
    %7 = vector.broadcast %c0_i32_1 : i32 to vector<1x64xi32>
    %8 = arith.cmpi slt, %4, %7 : vector<1x64xi32>
    %c0_i32_2 = arith.constant 0 : i32
    %9 = arith.cmpi slt, %2, %c0_i32_2 : i32
    %10 = vector.broadcast %9 : i1 to vector<1x64xi1>
    %11 = vector.broadcast %10 : vector<1x64xi1> to vector<1x64xi1>
    %12 = arith.xori %8, %11 : vector<1x64xi1>
    %13 = arith.andi %12, %6 : vector<1x64xi1>
    %14 = vector.broadcast %2 : i32 to vector<1x64xi32>
    %15 = arith.addi %4, %14 : vector<1x64xi32>
    %16 = arith.select %13, %15, %4 : vector<1x64xi1>, vector<1x64xi32>
    %c8_i32_3 = arith.constant 8 : i32
    %17 = vector.broadcast %c8_i32_3 : i32 to vector<1x64xi32>
    %18 = arith.cmpi sge, %0, %17 : vector<1x64xi32>
    %c56_i32 = arith.constant 56 : i32
    %19 = vector.broadcast %c56_i32 : i32 to vector<1x64xi32>
    %20 = arith.cmpi slt, %0, %19 : vector<1x64xi32>
    %c1_i32_4 = arith.constant 1 : i32
    %21 = vector.broadcast %c1_i32_4 : i32 to vector<1x64xi32>
    %22 = arith.cmpi sge, %16, %21 : vector<1x64xi32>
    %c6_i32 = arith.constant 6 : i32
    %23 = vector.broadcast %c6_i32 : i32 to vector<1x64xi32>
    %24 = arith.cmpi sle, %16, %23 : vector<1x64xi32>
    %25 = arith.andi %18, %22 : vector<1x64xi1>
    %26 = arith.andi %18, %24 : vector<1x64xi1>
    %27 = arith.andi %20, %22 : vector<1x64xi1>
    %28 = arith.andi %20, %24 : vector<1x64xi1>
    %c0 = arith.constant 0 : index
    %c0_5 = arith.constant 0 : index
    %29 = vector.load %arg2[%c0, %c0_5] : memref<4x8xf32, #tpu.memory_space<vmem>>, vector<4x8xf32>
    %c0_6 = arith.constant 0 : index
    %c0_7 = arith.constant 0 : index
    %30 = vector.load %arg3[%c0_6, %c0_7] : memref<4x1xf32, #tpu.memory_space<vmem>>, vector<4x1xf32>
    %c0_8 = arith.constant 0 : index
    %c0_9 = arith.constant 0 : index
    %31 = vector.load %arg4[%c0_8, %c0_9] : memref<4x1xf32, #tpu.memory_space<vmem>>, vector<4x1xf32>
    %c0_10 = arith.constant 0 : index
    %c0_11 = arith.constant 0 : index
    %32 = vector.load %arg5[%c0_10, %c0_11] : memref<4x1xf32, #tpu.memory_space<vmem>>, vector<4x1xf32>
    %c0_12 = arith.constant 0 : index
    %c0_13 = arith.constant 0 : index
    %c0_14 = arith.constant 0 : index
    %33 = vector.load %arg6[%c0_12, %c0_13, %c0_14] : memref<9x8x4xf32, #tpu.memory_space<vmem>>, vector<9x8x4xf32>
    %c0_15 = arith.constant 0 : index
    %c0_16 = arith.constant 0 : index
    %34 = vector.load %arg7[%c0_15, %c0_16] : memref<8x1xf32, #tpu.memory_space<vmem>>, vector<8x1xf32>
    %c0_17 = arith.constant 0 : index
    %c0_18 = arith.constant 0 : index
    %35 = vector.load %arg8[%c0_17, %c0_18] : memref<8x1xf32, #tpu.memory_space<vmem>>, vector<8x1xf32>
    %c0_19 = arith.constant 0 : index
    %c0_20 = arith.constant 0 : index
    %36 = vector.load %arg9[%c0_19, %c0_20] : memref<8x1xf32, #tpu.memory_space<vmem>>, vector<8x1xf32>
    %c0_21 = arith.constant 0 : index
    %c0_22 = arith.constant 0 : index
    %c0_23 = arith.constant 0 : index
    %37 = vector.load %arg1[%c0_21, %c0_22, %c0_23] : memref<2x8x64xf32, #tpu.memory_space<vmem>>, vector<1x8x64xf32>
    %38 = vector.shape_cast %37 : vector<1x8x64xf32> to vector<8x64xf32>
    %cst = arith.constant dense<0.000000e+00> : vector<4x64xf32>
    %39 = tpu.matmul %29, %38, %cst {dimension_numbers = #tpu.dot_dimension_numbers<[1], [0], [0], [1], [0, 0, 1, 1], [], []>} : vector<4x8xf32>, vector<8x64xf32>, vector<4x64xf32> -> vector<4x64xf32>
    %cst_24 = arith.constant dense<0.000000e+00> : vector<4xf32>
    %40 = vector.multi_reduction <add>, %39, %cst_24 [1] : vector<4x64xf32> to vector<4xf32>
    %41 = vector.shape_cast %40 : vector<4xf32> to vector<4x1xf32>
    %cst_25 = arith.constant 1.562500e-02 : f32
    %42 = vector.broadcast %cst_25 : f32 to vector<4x1xf32>
    %43 = arith.mulf %41, %42 : vector<4x1xf32>
    %44 = arith.mulf %39, %39 : vector<4x64xf32>
    %cst_26 = arith.constant dense<0.000000e+00> : vector<4xf32>
    %45 = vector.multi_reduction <add>, %44, %cst_26 [1] : vector<4x64xf32> to vector<4xf32>
    %46 = vector.shape_cast %45 : vector<4xf32> to vector<4x1xf32>
    %cst_27 = arith.constant 1.562500e-02 : f32
    %47 = vector.broadcast %cst_27 : f32 to vector<4x1xf32>
    %48 = arith.mulf %46, %47 : vector<4x1xf32>
    %49 = arith.mulf %43, %43 : vector<4x1xf32>
    %50 = arith.subf %48, %49 : vector<4x1xf32>
    %cst_28 = arith.constant 0.000000e+00 : f32
    %51 = vector.broadcast %cst_28 : f32 to vector<4x1xf32>
    %52 = arith.maximumf %50, %51 : vector<4x1xf32>
    %53 = vector.broadcast %43 : vector<4x1xf32> to vector<4x64xf32>
    %54 = arith.subf %39, %53 : vector<4x64xf32>
    %cst_29 = arith.constant 9.99999974E-6 : f32
    %55 = vector.broadcast %cst_29 : f32 to vector<4x1xf32>
    %56 = arith.addf %52, %55 : vector<4x1xf32>
    %57 = math.rsqrt %56 : vector<4x1xf32>
    %58 = vector.broadcast %57 : vector<4x1xf32> to vector<4x64xf32>
    %59 = arith.mulf %54, %58 : vector<4x64xf32>
    %60 = vector.broadcast %30 : vector<4x1xf32> to vector<4x64xf32>
    %61 = arith.mulf %59, %60 : vector<4x64xf32>
    %62 = vector.broadcast %31 : vector<4x1xf32> to vector<4x64xf32>
    %63 = arith.addf %61, %62 : vector<4x64xf32>
    %cst_30 = arith.constant 0.000000e+00 : f32
    %64 = vector.broadcast %cst_30 : f32 to vector<4x64xf32>
    %65 = arith.cmpf oge, %63, %64 : vector<4x64xf32>
    %66 = vector.broadcast %32 : vector<4x1xf32> to vector<4x64xf32>
    %67 = arith.mulf %66, %63 : vector<4x64xf32>
    %68 = arith.select %65, %63, %67 : vector<4x64xi1>, vector<4x64xf32>
    %c0_31 = arith.constant 0 : index
    %c0_32 = arith.constant 0 : index
    %c0_33 = arith.constant 0 : index
    %69 = vector.load %arg11[%c0_31, %c0_32, %c0_33] : memref<2x4x64xf32, #tpu.memory_space<vmem>>, vector<1x4x64xf32>
    %70 = vector.shape_cast %69 : vector<1x4x64xf32> to vector<4x64xf32>
    %71 = vector.shape_cast %68 : vector<4x64xf32> to vector<1x4x64xf32>
    tpu.vector_store %arg11[%c0_31, %c0_32, %c0_33], %71 {strides = array<i32>} : memref<2x4x64xf32, #tpu.memory_space<vmem>>, vector<1x4x64xf32>,
    %72 = vector.extract_strided_slice %68 {offsets = [0, 55], sizes = [4, 9], strides = [1, 1]} : vector<4x64xf32> to vector<4x9xf32>
    %73 = vector.extract_strided_slice %68 {offsets = [0, 0], sizes = [4, 55], strides = [1, 1]} : vector<4x64xf32> to vector<4x55xf32>
    %74 = tpu.concatenate %72, %73 in 1 : vector<4x9xf32>, vector<4x55xf32> -> vector<4x64xf32>
    %cst_34 = arith.constant 0.000000e+00 : f32
    %75 = vector.shape_cast %25 : vector<1x64xi1> to vector<1x64xi1>
    %76 = vector.broadcast %75 : vector<1x64xi1> to vector<4x64xi1>
    %77 = vector.broadcast %cst_34 : f32 to vector<4x64xf32>
    %78 = arith.select %76, %74, %77 : vector<4x64xi1>, vector<4x64xf32>
    %79 = vector.extract_strided_slice %33 {offsets = [0, 0, 0], sizes = [1, 8, 4], strides = [1, 1, 1]} : vector<9x8x4xf32> to vector<1x8x4xf32>
    %80 = vector.shape_cast %79 : vector<1x8x4xf32> to vector<8x4xf32>
    %cst_35 = arith.constant dense<0.000000e+00> : vector<8x64xf32>
    %81 = tpu.matmul %80, %78, %cst_35 {dimension_numbers = #tpu.dot_dimension_numbers<[1], [0], [0], [1], [0, 0, 1, 1], [], []>} : vector<8x4xf32>, vector<4x64xf32>, vector<8x64xf32> -> vector<8x64xf32>
    %82 = vector.extract_strided_slice %68 {offsets = [0, 56], sizes = [4, 8], strides = [1, 1]} : vector<4x64xf32> to vector<4x8xf32>
    %83 = vector.extract_strided_slice %68 {offsets = [0, 0], sizes = [4, 56], strides = [1, 1]} : vector<4x64xf32> to vector<4x56xf32>
    %84 = tpu.concatenate %82, %83 in 1 : vector<4x8xf32>, vector<4x56xf32> -> vector<4x64xf32>
    %cst_36 = arith.constant 0.000000e+00 : f32
    %85 = vector.shape_cast %18 : vector<1x64xi1> to vector<1x64xi1>
    %86 = vector.broadcast %85 : vector<1x64xi1> to vector<4x64xi1>
    %87 = vector.broadcast %cst_36 : f32 to vector<4x64xf32>
    %88 = arith.select %86, %84, %87 : vector<4x64xi1>, vector<4x64xf32>
    %89 = vector.extract_strided_slice %33 {offsets = [1, 0, 0], sizes = [1, 8, 4], strides = [1, 1, 1]} : vector<9x8x4xf32> to vector<1x8x4xf32>
    %90 = vector.shape_cast %89 : vector<1x8x4xf32> to vector<8x4xf32>
    %cst_37 = arith.constant dense<0.000000e+00> : vector<8x64xf32>
    %91 = tpu.matmul %90, %88, %cst_37 {dimension_numbers = #tpu.dot_dimension_numbers<[1], [0], [0], [1], [0, 0, 1, 1], [], []>} : vector<8x4xf32>, vector<4x64xf32>, vector<8x64xf32> -> vector<8x64xf32>
    %92 = arith.addf %81, %91 : vector<8x64xf32>
    %93 = vector.extract_strided_slice %68 {offsets = [0, 57], sizes = [4, 7], strides = [1, 1]} : vector<4x64xf32> to vector<4x7xf32>
    %94 = vector.extract_strided_slice %68 {offsets = [0, 0], sizes = [4, 57], strides = [1, 1]} : vector<4x64xf32> to vector<4x57xf32>
    %95 = tpu.concatenate %93, %94 in 1 : vector<4x7xf32>, vector<4x57xf32> -> vector<4x64xf32>
    %cst_38 = arith.constant 0.000000e+00 : f32
    %96 = vector.shape_cast %26 : vector<1x64xi1> to vector<1x64xi1>
    %97 = vector.broadcast %96 : vector<1x64xi1> to vector<4x64xi1>
    %98 = vector.broadcast %cst_38 : f32 to vector<4x64xf32>
    %99 = arith.select %97, %95, %98 : vector<4x64xi1>, vector<4x64xf32>
    %100 = vector.extract_strided_slice %33 {offsets = [2, 0, 0], sizes = [1, 8, 4], strides = [1, 1, 1]} : vector<9x8x4xf32> to vector<1x8x4xf32>
    %101 = vector.shape_cast %100 : vector<1x8x4xf32> to vector<8x4xf32>
    %cst_39 = arith.constant dense<0.000000e+00> : vector<8x64xf32>
    %102 = tpu.matmul %101, %99, %cst_39 {dimension_numbers = #tpu.dot_dimension_numbers<[1], [0], [0], [1], [0, 0, 1, 1], [], []>} : vector<8x4xf32>, vector<4x64xf32>, vector<8x64xf32> -> vector<8x64xf32>
    %103 = arith.addf %92, %102 : vector<8x64xf32>
    %104 = vector.extract_strided_slice %68 {offsets = [0, 63], sizes = [4, 1], strides = [1, 1]} : vector<4x64xf32> to vector<4x1xf32>
    %105 = vector.extract_strided_slice %68 {offsets = [0, 0], sizes = [4, 63], strides = [1, 1]} : vector<4x64xf32> to vector<4x63xf32>
    %106 = tpu.concatenate %104, %105 in 1 : vector<4x1xf32>, vector<4x63xf32> -> vector<4x64xf32>
    %cst_40 = arith.constant 0.000000e+00 : f32
    %107 = vector.shape_cast %22 : vector<1x64xi1> to vector<1x64xi1>
    %108 = vector.broadcast %107 : vector<1x64xi1> to vector<4x64xi1>
    %109 = vector.broadcast %cst_40 : f32 to vector<4x64xf32>
    %110 = arith.select %108, %106, %109 : vector<4x64xi1>, vector<4x64xf32>
    %111 = vector.extract_strided_slice %33 {offsets = [3, 0, 0], sizes = [1, 8, 4], strides = [1, 1, 1]} : vector<9x8x4xf32> to vector<1x8x4xf32>
    %112 = vector.shape_cast %111 : vector<1x8x4xf32> to vector<8x4xf32>
    %cst_41 = arith.constant dense<0.000000e+00> : vector<8x64xf32>
    %113 = tpu.matmul %112, %110, %cst_41 {dimension_numbers = #tpu.dot_dimension_numbers<[1], [0], [0], [1], [0, 0, 1, 1], [], []>} : vector<8x4xf32>, vector<4x64xf32>, vector<8x64xf32> -> vector<8x64xf32>
    %114 = arith.addf %103, %113 : vector<8x64xf32>
    %115 = vector.extract_strided_slice %33 {offsets = [4, 0, 0], sizes = [1, 8, 4], strides = [1, 1, 1]} : vector<9x8x4xf32> to vector<1x8x4xf32>
    %116 = vector.shape_cast %115 : vector<1x8x4xf32> to vector<8x4xf32>
    %cst_42 = arith.constant dense<0.000000e+00> : vector<8x64xf32>
    %117 = tpu.matmul %116, %68, %cst_42 {dimension_numbers = #tpu.dot_dimension_numbers<[1], [0], [0], [1], [0, 0, 1, 1], [], []>} : vector<8x4xf32>, vector<4x64xf32>, vector<8x64xf32> -> vector<8x64xf32>
    %118 = arith.addf %114, %117 : vector<8x64xf32>
    %119 = vector.extract_strided_slice %68 {offsets = [0, 1], sizes = [4, 63], strides = [1, 1]} : vector<4x64xf32> to vector<4x63xf32>
    %120 = vector.extract_strided_slice %68 {offsets = [0, 0], sizes = [4, 1], strides = [1, 1]} : vector<4x64xf32> to vector<4x1xf32>
    %121 = tpu.concatenate %119, %120 in 1 : vector<4x63xf32>, vector<4x1xf32> -> vector<4x64xf32>
    %cst_43 = arith.constant 0.000000e+00 : f32
    %122 = vector.shape_cast %24 : vector<1x64xi1> to vector<1x64xi1>
    %123 = vector.broadcast %122 : vector<1x64xi1> to vector<4x64xi1>
    %124 = vector.broadcast %cst_43 : f32 to vector<4x64xf32>
    %125 = arith.select %123, %121, %124 : vector<4x64xi1>, vector<4x64xf32>
    %126 = vector.extract_strided_slice %33 {offsets = [5, 0, 0], sizes = [1, 8, 4], strides = [1, 1, 1]} : vector<9x8x4xf32> to vector<1x8x4xf32>
    %127 = vector.shape_cast %126 : vector<1x8x4xf32> to vector<8x4xf32>
    %cst_44 = arith.constant dense<0.000000e+00> : vector<8x64xf32>
    %128 = tpu.matmul %127, %125, %cst_44 {dimension_numbers = #tpu.dot_dimension_numbers<[1], [0], [0], [1], [0, 0, 1, 1], [], []>} : vector<8x4xf32>, vector<4x64xf32>, vector<8x64xf32> -> vector<8x64xf32>
    %129 = arith.addf %118, %128 : vector<8x64xf32>
    %130 = vector.extract_strided_slice %68 {offsets = [0, 7], sizes = [4, 57], strides = [1, 1]} : vector<4x64xf32> to vector<4x57xf32>
    %131 = vector.extract_strided_slice %68 {offsets = [0, 0], sizes = [4, 7], strides = [1, 1]} : vector<4x64xf32> to vector<4x7xf32>
    %132 = tpu.concatenate %130, %131 in 1 : vector<4x57xf32>, vector<4x7xf32> -> vector<4x64xf32>
    %cst_45 = arith.constant 0.000000e+00 : f32
    %133 = vector.shape_cast %27 : vector<1x64xi1> to vector<1x64xi1>
    %134 = vector.broadcast %133 : vector<1x64xi1> to vector<4x64xi1>
    %135 = vector.broadcast %cst_45 : f32 to vector<4x64xf32>
    %136 = arith.select %134, %132, %135 : vector<4x64xi1>, vector<4x64xf32>
    %137 = vector.extract_strided_slice %33 {offsets = [6, 0, 0], sizes = [1, 8, 4], strides = [1, 1, 1]} : vector<9x8x4xf32> to vector<1x8x4xf32>
    %138 = vector.shape_cast %137 : vector<1x8x4xf32> to vector<8x4xf32>
    %cst_46 = arith.constant dense<0.000000e+00> : vector<8x64xf32>
    %139 = tpu.matmul %138, %136, %cst_46 {dimension_numbers = #tpu.dot_dimension_numbers<[1], [0], [0], [1], [0, 0, 1, 1], [], []>} : vector<8x4xf32>, vector<4x64xf32>, vector<8x64xf32> -> vector<8x64xf32>
    %140 = arith.addf %129, %139 : vector<8x64xf32>
    %141 = vector.extract_strided_slice %68 {offsets = [0, 8], sizes = [4, 56], strides = [1, 1]} : vector<4x64xf32> to vector<4x56xf32>
    %142 = vector.extract_strided_slice %68 {offsets = [0, 0], sizes = [4, 8], strides = [1, 1]} : vector<4x64xf32> to vector<4x8xf32>
    %143 = tpu.concatenate %141, %142 in 1 : vector<4x56xf32>, vector<4x8xf32> -> vector<4x64xf32>
    %cst_47 = arith.constant 0.000000e+00 : f32
    %144 = vector.shape_cast %20 : vector<1x64xi1> to vector<1x64xi1>
    %145 = vector.broadcast %144 : vector<1x64xi1> to vector<4x64xi1>
    %146 = vector.broadcast %cst_47 : f32 to vector<4x64xf32>
    %147 = arith.select %145, %143, %146 : vector<4x64xi1>, vector<4x64xf32>
    %148 = vector.extract_strided_slice %33 {offsets = [7, 0, 0], sizes = [1, 8, 4], strides = [1, 1, 1]} : vector<9x8x4xf32> to vector<1x8x4xf32>
    %149 = vector.shape_cast %148 : vector<1x8x4xf32> to vector<8x4xf32>
    %cst_48 = arith.constant dense<0.000000e+00> : vector<8x64xf32>
    %150 = tpu.matmul %149, %147, %cst_48 {dimension_numbers = #tpu.dot_dimension_numbers<[1], [0], [0], [1], [0, 0, 1, 1], [], []>} : vector<8x4xf32>, vector<4x64xf32>, vector<8x64xf32> -> vector<8x64xf32>
    %151 = arith.addf %140, %150 : vector<8x64xf32>
    %152 = vector.extract_strided_slice %68 {offsets = [0, 9], sizes = [4, 55], strides = [1, 1]} : vector<4x64xf32> to vector<4x55xf32>
    %153 = vector.extract_strided_slice %68 {offsets = [0, 0], sizes = [4, 9], strides = [1, 1]} : vector<4x64xf32> to vector<4x9xf32>
    %154 = tpu.concatenate %152, %153 in 1 : vector<4x55xf32>, vector<4x9xf32> -> vector<4x64xf32>
    %cst_49 = arith.constant 0.000000e+00 : f32
    %155 = vector.shape_cast %28 : vector<1x64xi1> to vector<1x64xi1>
    %156 = vector.broadcast %155 : vector<1x64xi1> to vector<4x64xi1>
    %157 = vector.broadcast %cst_49 : f32 to vector<4x64xf32>
    %158 = arith.select %156, %154, %157 : vector<4x64xi1>, vector<4x64xf32>
    %159 = vector.extract_strided_slice %33 {offsets = [8, 0, 0], sizes = [1, 8, 4], strides = [1, 1, 1]} : vector<9x8x4xf32> to vector<1x8x4xf32>
    %160 = vector.shape_cast %159 : vector<1x8x4xf32> to vector<8x4xf32>
    %cst_50 = arith.constant dense<0.000000e+00> : vector<8x64xf32>
    %161 = tpu.matmul %160, %158, %cst_50 {dimension_numbers = #tpu.dot_dimension_numbers<[1], [0], [0], [1], [0, 0, 1, 1], [], []>} : vector<8x4xf32>, vector<4x64xf32>, vector<8x64xf32> -> vector<8x64xf32>
    %162 = arith.addf %151, %161 : vector<8x64xf32>
    %cst_51 = arith.constant dense<0.000000e+00> : vector<8xf32>
    %163 = vector.multi_reduction <add>, %162, %cst_51 [1] : vector<8x64xf32> to vector<8xf32>
    %164 = vector.shape_cast %163 : vector<8xf32> to vector<8x1xf32>
    %cst_52 = arith.constant 1.562500e-02 : f32
    %165 = vector.broadcast %cst_52 : f32 to vector<8x1xf32>
    %166 = arith.mulf %164, %165 : vector<8x1xf32>
    %167 = arith.mulf %162, %162 : vector<8x64xf32>
    %cst_53 = arith.constant dense<0.000000e+00> : vector<8xf32>
    %168 = vector.multi_reduction <add>, %167, %cst_53 [1] : vector<8x64xf32> to vector<8xf32>
    %169 = vector.shape_cast %168 : vector<8xf32> to vector<8x1xf32>
    %cst_54 = arith.constant 1.562500e-02 : f32
    %170 = vector.broadcast %cst_54 : f32 to vector<8x1xf32>
    %171 = arith.mulf %169, %170 : vector<8x1xf32>
    %172 = arith.mulf %166, %166 : vector<8x1xf32>
    %173 = arith.subf %171, %172 : vector<8x1xf32>
    %cst_55 = arith.constant 0.000000e+00 : f32
    %174 = vector.broadcast %cst_55 : f32 to vector<8x1xf32>
    %175 = arith.maximumf %173, %174 : vector<8x1xf32>
    %176 = vector.broadcast %166 : vector<8x1xf32> to vector<8x64xf32>
    %177 = arith.subf %162, %176 : vector<8x64xf32>
    %cst_56 = arith.constant 9.99999974E-6 : f32
    %178 = vector.broadcast %cst_56 : f32 to vector<8x1xf32>
    %179 = arith.addf %175, %178 : vector<8x1xf32>
    %180 = math.rsqrt %179 : vector<8x1xf32>
    %181 = vector.broadcast %180 : vector<8x1xf32> to vector<8x64xf32>
    %182 = arith.mulf %177, %181 : vector<8x64xf32>
    %183 = vector.broadcast %34 : vector<8x1xf32> to vector<8x64xf32>
    %184 = arith.mulf %182, %183 : vector<8x64xf32>
    %185 = vector.broadcast %35 : vector<8x1xf32> to vector<8x64xf32>
    %186 = arith.addf %184, %185 : vector<8x64xf32>
    %cst_57 = arith.constant 0.000000e+00 : f32
    %187 = vector.broadcast %cst_57 : f32 to vector<8x64xf32>
    %188 = arith.cmpf oge, %186, %187 : vector<8x64xf32>
    %189 = vector.broadcast %36 : vector<8x1xf32> to vector<8x64xf32>
    %190 = arith.mulf %189, %186 : vector<8x64xf32>
    %191 = arith.select %188, %186, %190 : vector<8x64xi1>, vector<8x64xf32>
    %c0_58 = arith.constant 0 : index
    %c0_59 = arith.constant 0 : index
    %c0_60 = arith.constant 0 : index
    %192 = vector.load %arg10[%c0_58, %c0_59, %c0_60] : memref<2x8x64xf32, #tpu.memory_space<vmem>>, vector<1x8x64xf32>
    %193 = vector.shape_cast %192 : vector<1x8x64xf32> to vector<8x64xf32>
    %194 = vector.shape_cast %191 : vector<8x64xf32> to vector<1x8x64xf32>
    tpu.vector_store %arg10[%c0_58, %c0_59, %c0_60], %194 {strides = array<i32>} : memref<2x8x64xf32, #tpu.memory_space<vmem>>, vector<1x8x64xf32>,
    %c1 = arith.constant 1 : index
    %c0_61 = arith.constant 0 : index
    %c0_62 = arith.constant 0 : index
    %195 = vector.load %arg1[%c1, %c0_61, %c0_62] : memref<2x8x64xf32, #tpu.memory_space<vmem>>, vector<1x8x64xf32>
    %196 = vector.shape_cast %195 : vector<1x8x64xf32> to vector<8x64xf32>
    %cst_63 = arith.constant dense<0.000000e+00> : vector<4x64xf32>
    %197 = tpu.matmul %29, %196, %cst_63 {dimension_numbers = #tpu.dot_dimension_numbers<[1], [0], [0], [1], [0, 0, 1, 1], [], []>} : vector<4x8xf32>, vector<8x64xf32>, vector<4x64xf32> -> vector<4x64xf32>
    %cst_64 = arith.constant dense<0.000000e+00> : vector<4xf32>
    %198 = vector.multi_reduction <add>, %197, %cst_64 [1] : vector<4x64xf32> to vector<4xf32>
    %199 = vector.shape_cast %198 : vector<4xf32> to vector<4x1xf32>
    %cst_65 = arith.constant 1.562500e-02 : f32
    %200 = vector.broadcast %cst_65 : f32 to vector<4x1xf32>
    %201 = arith.mulf %199, %200 : vector<4x1xf32>
    %202 = arith.mulf %197, %197 : vector<4x64xf32>
    %cst_66 = arith.constant dense<0.000000e+00> : vector<4xf32>
    %203 = vector.multi_reduction <add>, %202, %cst_66 [1] : vector<4x64xf32> to vector<4xf32>
    %204 = vector.shape_cast %203 : vector<4xf32> to vector<4x1xf32>
    %cst_67 = arith.constant 1.562500e-02 : f32
    %205 = vector.broadcast %cst_67 : f32 to vector<4x1xf32>
    %206 = arith.mulf %204, %205 : vector<4x1xf32>
    %207 = arith.mulf %201, %201 : vector<4x1xf32>
    %208 = arith.subf %206, %207 : vector<4x1xf32>
    %cst_68 = arith.constant 0.000000e+00 : f32
    %209 = vector.broadcast %cst_68 : f32 to vector<4x1xf32>
    %210 = arith.maximumf %208, %209 : vector<4x1xf32>
    %211 = vector.broadcast %201 : vector<4x1xf32> to vector<4x64xf32>
    %212 = arith.subf %197, %211 : vector<4x64xf32>
    %cst_69 = arith.constant 9.99999974E-6 : f32
    %213 = vector.broadcast %cst_69 : f32 to vector<4x1xf32>
    %214 = arith.addf %210, %213 : vector<4x1xf32>
    %215 = math.rsqrt %214 : vector<4x1xf32>
    %216 = vector.broadcast %215 : vector<4x1xf32> to vector<4x64xf32>
    %217 = arith.mulf %212, %216 : vector<4x64xf32>
    %218 = vector.broadcast %30 : vector<4x1xf32> to vector<4x64xf32>
    %219 = arith.mulf %217, %218 : vector<4x64xf32>
    %220 = vector.broadcast %31 : vector<4x1xf32> to vector<4x64xf32>
    %221 = arith.addf %219, %220 : vector<4x64xf32>
    %cst_70 = arith.constant 0.000000e+00 : f32
    %222 = vector.broadcast %cst_70 : f32 to vector<4x64xf32>
    %223 = arith.cmpf oge, %221, %222 : vector<4x64xf32>
    %224 = vector.broadcast %32 : vector<4x1xf32> to vector<4x64xf32>
    %225 = arith.mulf %224, %221 : vector<4x64xf32>
    %226 = arith.select %223, %221, %225 : vector<4x64xi1>, vector<4x64xf32>
    %c1_71 = arith.constant 1 : index
    %c0_72 = arith.constant 0 : index
    %c0_73 = arith.constant 0 : index
    %227 = vector.load %arg11[%c1_71, %c0_72, %c0_73] : memref<2x4x64xf32, #tpu.memory_space<vmem>>, vector<1x4x64xf32>
    %228 = vector.shape_cast %227 : vector<1x4x64xf32> to vector<4x64xf32>
    %229 = vector.shape_cast %226 : vector<4x64xf32> to vector<1x4x64xf32>
    tpu.vector_store %arg11[%c1_71, %c0_72, %c0_73], %229 {strides = array<i32>} : memref<2x4x64xf32, #tpu.memory_space<vmem>>, vector<1x4x64xf32>,
    %230 = vector.extract_strided_slice %226 {offsets = [0, 55], sizes = [4, 9], strides = [1, 1]} : vector<4x64xf32> to vector<4x9xf32>
    %231 = vector.extract_strided_slice %226 {offsets = [0, 0], sizes = [4, 55], strides = [1, 1]} : vector<4x64xf32> to vector<4x55xf32>
    %232 = tpu.concatenate %230, %231 in 1 : vector<4x9xf32>, vector<4x55xf32> -> vector<4x64xf32>
    %cst_74 = arith.constant 0.000000e+00 : f32
    %233 = vector.shape_cast %25 : vector<1x64xi1> to vector<1x64xi1>
    %234 = vector.broadcast %233 : vector<1x64xi1> to vector<4x64xi1>
    %235 = vector.broadcast %cst_74 : f32 to vector<4x64xf32>
    %236 = arith.select %234, %232, %235 : vector<4x64xi1>, vector<4x64xf32>
    %237 = vector.extract_strided_slice %33 {offsets = [0, 0, 0], sizes = [1, 8, 4], strides = [1, 1, 1]} : vector<9x8x4xf32> to vector<1x8x4xf32>
    %238 = vector.shape_cast %237 : vector<1x8x4xf32> to vector<8x4xf32>
    %cst_75 = arith.constant dense<0.000000e+00> : vector<8x64xf32>
    %239 = tpu.matmul %238, %236, %cst_75 {dimension_numbers = #tpu.dot_dimension_numbers<[1], [0], [0], [1], [0, 0, 1, 1], [], []>} : vector<8x4xf32>, vector<4x64xf32>, vector<8x64xf32> -> vector<8x64xf32>
    %240 = vector.extract_strided_slice %226 {offsets = [0, 56], sizes = [4, 8], strides = [1, 1]} : vector<4x64xf32> to vector<4x8xf32>
    %241 = vector.extract_strided_slice %226 {offsets = [0, 0], sizes = [4, 56], strides = [1, 1]} : vector<4x64xf32> to vector<4x56xf32>
    %242 = tpu.concatenate %240, %241 in 1 : vector<4x8xf32>, vector<4x56xf32> -> vector<4x64xf32>
    %cst_76 = arith.constant 0.000000e+00 : f32
    %243 = vector.shape_cast %18 : vector<1x64xi1> to vector<1x64xi1>
    %244 = vector.broadcast %243 : vector<1x64xi1> to vector<4x64xi1>
    %245 = vector.broadcast %cst_76 : f32 to vector<4x64xf32>
    %246 = arith.select %244, %242, %245 : vector<4x64xi1>, vector<4x64xf32>
    %247 = vector.extract_strided_slice %33 {offsets = [1, 0, 0], sizes = [1, 8, 4], strides = [1, 1, 1]} : vector<9x8x4xf32> to vector<1x8x4xf32>
    %248 = vector.shape_cast %247 : vector<1x8x4xf32> to vector<8x4xf32>
    %cst_77 = arith.constant dense<0.000000e+00> : vector<8x64xf32>
    %249 = tpu.matmul %248, %246, %cst_77 {dimension_numbers = #tpu.dot_dimension_numbers<[1], [0], [0], [1], [0, 0, 1, 1], [], []>} : vector<8x4xf32>, vector<4x64xf32>, vector<8x64xf32> -> vector<8x64xf32>
    %250 = arith.addf %239, %249 : vector<8x64xf32>
    %251 = vector.extract_strided_slice %226 {offsets = [0, 57], sizes = [4, 7], strides = [1, 1]} : vector<4x64xf32> to vector<4x7xf32>
    %252 = vector.extract_strided_slice %226 {offsets = [0, 0], sizes = [4, 57], strides = [1, 1]} : vector<4x64xf32> to vector<4x57xf32>
    %253 = tpu.concatenate %251, %252 in 1 : vector<4x7xf32>, vector<4x57xf32> -> vector<4x64xf32>
    %cst_78 = arith.constant 0.000000e+00 : f32
    %254 = vector.shape_cast %26 : vector<1x64xi1> to vector<1x64xi1>
    %255 = vector.broadcast %254 : vector<1x64xi1> to vector<4x64xi1>
    %256 = vector.broadcast %cst_78 : f32 to vector<4x64xf32>
    %257 = arith.select %255, %253, %256 : vector<4x64xi1>, vector<4x64xf32>
    %258 = vector.extract_strided_slice %33 {offsets = [2, 0, 0], sizes = [1, 8, 4], strides = [1, 1, 1]} : vector<9x8x4xf32> to vector<1x8x4xf32>
    %259 = vector.shape_cast %258 : vector<1x8x4xf32> to vector<8x4xf32>
    %cst_79 = arith.constant dense<0.000000e+00> : vector<8x64xf32>
    %260 = tpu.matmul %259, %257, %cst_79 {dimension_numbers = #tpu.dot_dimension_numbers<[1], [0], [0], [1], [0, 0, 1, 1], [], []>} : vector<8x4xf32>, vector<4x64xf32>, vector<8x64xf32> -> vector<8x64xf32>
    %261 = arith.addf %250, %260 : vector<8x64xf32>
    %262 = vector.extract_strided_slice %226 {offsets = [0, 63], sizes = [4, 1], strides = [1, 1]} : vector<4x64xf32> to vector<4x1xf32>
    %263 = vector.extract_strided_slice %226 {offsets = [0, 0], sizes = [4, 63], strides = [1, 1]} : vector<4x64xf32> to vector<4x63xf32>
    %264 = tpu.concatenate %262, %263 in 1 : vector<4x1xf32>, vector<4x63xf32> -> vector<4x64xf32>
    %cst_80 = arith.constant 0.000000e+00 : f32
    %265 = vector.shape_cast %22 : vector<1x64xi1> to vector<1x64xi1>
    %266 = vector.broadcast %265 : vector<1x64xi1> to vector<4x64xi1>
    %267 = vector.broadcast %cst_80 : f32 to vector<4x64xf32>
    %268 = arith.select %266, %264, %267 : vector<4x64xi1>, vector<4x64xf32>
    %269 = vector.extract_strided_slice %33 {offsets = [3, 0, 0], sizes = [1, 8, 4], strides = [1, 1, 1]} : vector<9x8x4xf32> to vector<1x8x4xf32>
    %270 = vector.shape_cast %269 : vector<1x8x4xf32> to vector<8x4xf32>
    %cst_81 = arith.constant dense<0.000000e+00> : vector<8x64xf32>
    %271 = tpu.matmul %270, %268, %cst_81 {dimension_numbers = #tpu.dot_dimension_numbers<[1], [0], [0], [1], [0, 0, 1, 1], [], []>} : vector<8x4xf32>, vector<4x64xf32>, vector<8x64xf32> -> vector<8x64xf32>
    %272 = arith.addf %261, %271 : vector<8x64xf32>
    %273 = vector.extract_strided_slice %33 {offsets = [4, 0, 0], sizes = [1, 8, 4], strides = [1, 1, 1]} : vector<9x8x4xf32> to vector<1x8x4xf32>
    %274 = vector.shape_cast %273 : vector<1x8x4xf32> to vector<8x4xf32>
    %cst_82 = arith.constant dense<0.000000e+00> : vector<8x64xf32>
    %275 = tpu.matmul %274, %226, %cst_82 {dimension_numbers = #tpu.dot_dimension_numbers<[1], [0], [0], [1], [0, 0, 1, 1], [], []>} : vector<8x4xf32>, vector<4x64xf32>, vector<8x64xf32> -> vector<8x64xf32>
    %276 = arith.addf %272, %275 : vector<8x64xf32>
    %277 = vector.extract_strided_slice %226 {offsets = [0, 1], sizes = [4, 63], strides = [1, 1]} : vector<4x64xf32> to vector<4x63xf32>
    %278 = vector.extract_strided_slice %226 {offsets = [0, 0], sizes = [4, 1], strides = [1, 1]} : vector<4x64xf32> to vector<4x1xf32>
    %279 = tpu.concatenate %277, %278 in 1 : vector<4x63xf32>, vector<4x1xf32> -> vector<4x64xf32>
    %cst_83 = arith.constant 0.000000e+00 : f32
    %280 = vector.shape_cast %24 : vector<1x64xi1> to vector<1x64xi1>
    %281 = vector.broadcast %280 : vector<1x64xi1> to vector<4x64xi1>
    %282 = vector.broadcast %cst_83 : f32 to vector<4x64xf32>
    %283 = arith.select %281, %279, %282 : vector<4x64xi1>, vector<4x64xf32>
    %284 = vector.extract_strided_slice %33 {offsets = [5, 0, 0], sizes = [1, 8, 4], strides = [1, 1, 1]} : vector<9x8x4xf32> to vector<1x8x4xf32>
    %285 = vector.shape_cast %284 : vector<1x8x4xf32> to vector<8x4xf32>
    %cst_84 = arith.constant dense<0.000000e+00> : vector<8x64xf32>
    %286 = tpu.matmul %285, %283, %cst_84 {dimension_numbers = #tpu.dot_dimension_numbers<[1], [0], [0], [1], [0, 0, 1, 1], [], []>} : vector<8x4xf32>, vector<4x64xf32>, vector<8x64xf32> -> vector<8x64xf32>
    %287 = arith.addf %276, %286 : vector<8x64xf32>
    %288 = vector.extract_strided_slice %226 {offsets = [0, 7], sizes = [4, 57], strides = [1, 1]} : vector<4x64xf32> to vector<4x57xf32>
    %289 = vector.extract_strided_slice %226 {offsets = [0, 0], sizes = [4, 7], strides = [1, 1]} : vector<4x64xf32> to vector<4x7xf32>
    %290 = tpu.concatenate %288, %289 in 1 : vector<4x57xf32>, vector<4x7xf32> -> vector<4x64xf32>
    %cst_85 = arith.constant 0.000000e+00 : f32
    %291 = vector.shape_cast %27 : vector<1x64xi1> to vector<1x64xi1>
    %292 = vector.broadcast %291 : vector<1x64xi1> to vector<4x64xi1>
    %293 = vector.broadcast %cst_85 : f32 to vector<4x64xf32>
    %294 = arith.select %292, %290, %293 : vector<4x64xi1>, vector<4x64xf32>
    %295 = vector.extract_strided_slice %33 {offsets = [6, 0, 0], sizes = [1, 8, 4], strides = [1, 1, 1]} : vector<9x8x4xf32> to vector<1x8x4xf32>
    %296 = vector.shape_cast %295 : vector<1x8x4xf32> to vector<8x4xf32>
    %cst_86 = arith.constant dense<0.000000e+00> : vector<8x64xf32>
    %297 = tpu.matmul %296, %294, %cst_86 {dimension_numbers = #tpu.dot_dimension_numbers<[1], [0], [0], [1], [0, 0, 1, 1], [], []>} : vector<8x4xf32>, vector<4x64xf32>, vector<8x64xf32> -> vector<8x64xf32>
    %298 = arith.addf %287, %297 : vector<8x64xf32>
    %299 = vector.extract_strided_slice %226 {offsets = [0, 8], sizes = [4, 56], strides = [1, 1]} : vector<4x64xf32> to vector<4x56xf32>
    %300 = vector.extract_strided_slice %226 {offsets = [0, 0], sizes = [4, 8], strides = [1, 1]} : vector<4x64xf32> to vector<4x8xf32>
    %301 = tpu.concatenate %299, %300 in 1 : vector<4x56xf32>, vector<4x8xf32> -> vector<4x64xf32>
    %cst_87 = arith.constant 0.000000e+00 : f32
    %302 = vector.shape_cast %20 : vector<1x64xi1> to vector<1x64xi1>
    %303 = vector.broadcast %302 : vector<1x64xi1> to vector<4x64xi1>
    %304 = vector.broadcast %cst_87 : f32 to vector<4x64xf32>
    %305 = arith.select %303, %301, %304 : vector<4x64xi1>, vector<4x64xf32>
    %306 = vector.extract_strided_slice %33 {offsets = [7, 0, 0], sizes = [1, 8, 4], strides = [1, 1, 1]} : vector<9x8x4xf32> to vector<1x8x4xf32>
    %307 = vector.shape_cast %306 : vector<1x8x4xf32> to vector<8x4xf32>
    %cst_88 = arith.constant dense<0.000000e+00> : vector<8x64xf32>
    %308 = tpu.matmul %307, %305, %cst_88 {dimension_numbers = #tpu.dot_dimension_numbers<[1], [0], [0], [1], [0, 0, 1, 1], [], []>} : vector<8x4xf32>, vector<4x64xf32>, vector<8x64xf32> -> vector<8x64xf32>
    %309 = arith.addf %298, %308 : vector<8x64xf32>
    %310 = vector.extract_strided_slice %226 {offsets = [0, 9], sizes = [4, 55], strides = [1, 1]} : vector<4x64xf32> to vector<4x55xf32>
    %311 = vector.extract_strided_slice %226 {offsets = [0, 0], sizes = [4, 9], strides = [1, 1]} : vector<4x64xf32> to vector<4x9xf32>
    %312 = tpu.concatenate %310, %311 in 1 : vector<4x55xf32>, vector<4x9xf32> -> vector<4x64xf32>
    %cst_89 = arith.constant 0.000000e+00 : f32
    %313 = vector.shape_cast %28 : vector<1x64xi1> to vector<1x64xi1>
    %314 = vector.broadcast %313 : vector<1x64xi1> to vector<4x64xi1>
    %315 = vector.broadcast %cst_89 : f32 to vector<4x64xf32>
    %316 = arith.select %314, %312, %315 : vector<4x64xi1>, vector<4x64xf32>
    %317 = vector.extract_strided_slice %33 {offsets = [8, 0, 0], sizes = [1, 8, 4], strides = [1, 1, 1]} : vector<9x8x4xf32> to vector<1x8x4xf32>
    %318 = vector.shape_cast %317 : vector<1x8x4xf32> to vector<8x4xf32>
    %cst_90 = arith.constant dense<0.000000e+00> : vector<8x64xf32>
    %319 = tpu.matmul %318, %316, %cst_90 {dimension_numbers = #tpu.dot_dimension_numbers<[1], [0], [0], [1], [0, 0, 1, 1], [], []>} : vector<8x4xf32>, vector<4x64xf32>, vector<8x64xf32> -> vector<8x64xf32>
    %320 = arith.addf %309, %319 : vector<8x64xf32>
    %cst_91 = arith.constant dense<0.000000e+00> : vector<8xf32>
    %321 = vector.multi_reduction <add>, %320, %cst_91 [1] : vector<8x64xf32> to vector<8xf32>
    %322 = vector.shape_cast %321 : vector<8xf32> to vector<8x1xf32>
    %cst_92 = arith.constant 1.562500e-02 : f32
    %323 = vector.broadcast %cst_92 : f32 to vector<8x1xf32>
    %324 = arith.mulf %322, %323 : vector<8x1xf32>
    %325 = arith.mulf %320, %320 : vector<8x64xf32>
    %cst_93 = arith.constant dense<0.000000e+00> : vector<8xf32>
    %326 = vector.multi_reduction <add>, %325, %cst_93 [1] : vector<8x64xf32> to vector<8xf32>
    %327 = vector.shape_cast %326 : vector<8xf32> to vector<8x1xf32>
    %cst_94 = arith.constant 1.562500e-02 : f32
    %328 = vector.broadcast %cst_94 : f32 to vector<8x1xf32>
    %329 = arith.mulf %327, %328 : vector<8x1xf32>
    %330 = arith.mulf %324, %324 : vector<8x1xf32>
    %331 = arith.subf %329, %330 : vector<8x1xf32>
    %cst_95 = arith.constant 0.000000e+00 : f32
    %332 = vector.broadcast %cst_95 : f32 to vector<8x1xf32>
    %333 = arith.maximumf %331, %332 : vector<8x1xf32>
    %334 = vector.broadcast %324 : vector<8x1xf32> to vector<8x64xf32>
    %335 = arith.subf %320, %334 : vector<8x64xf32>
    %cst_96 = arith.constant 9.99999974E-6 : f32
    %336 = vector.broadcast %cst_96 : f32 to vector<8x1xf32>
    %337 = arith.addf %333, %336 : vector<8x1xf32>
    %338 = math.rsqrt %337 : vector<8x1xf32>
    %339 = vector.broadcast %338 : vector<8x1xf32> to vector<8x64xf32>
    %340 = arith.mulf %335, %339 : vector<8x64xf32>
    %341 = vector.broadcast %34 : vector<8x1xf32> to vector<8x64xf32>
    %342 = arith.mulf %340, %341 : vector<8x64xf32>
    %343 = vector.broadcast %35 : vector<8x1xf32> to vector<8x64xf32>
    %344 = arith.addf %342, %343 : vector<8x64xf32>
    %cst_97 = arith.constant 0.000000e+00 : f32
    %345 = vector.broadcast %cst_97 : f32 to vector<8x64xf32>
    %346 = arith.cmpf oge, %344, %345 : vector<8x64xf32>
    %347 = vector.broadcast %36 : vector<8x1xf32> to vector<8x64xf32>
    %348 = arith.mulf %347, %344 : vector<8x64xf32>
    %349 = arith.select %346, %344, %348 : vector<8x64xi1>, vector<8x64xf32>
    %c1_98 = arith.constant 1 : index
    %c0_99 = arith.constant 0 : index
    %c0_100 = arith.constant 0 : index
    %350 = vector.load %arg10[%c1_98, %c0_99, %c0_100] : memref<2x8x64xf32, #tpu.memory_space<vmem>>, vector<1x8x64xf32>
    %351 = vector.shape_cast %350 : vector<1x8x64xf32> to vector<8x64xf32>
    %352 = vector.shape_cast %349 : vector<8x64xf32> to vector<1x8x64xf32>
    tpu.vector_store %arg10[%c1_98, %c0_99, %c0_100], %352 {strides = array<i32>} : memref<2x8x64xf32, #tpu.memory_space<vmem>>, vector<1x8x64xf32>,
    return
  }
  func.func @transform_0(%arg0: i32) -> (i32, i32, i32) {
    %c0_i32 = arith.constant 0 : i32
    %c0_i32_0 = arith.constant 0 : i32
    %c0_i32_1 = arith.constant 0 : i32
    return %arg0, %c0_i32, %c0_i32_0 : i32, i32, i32
  }
  func.func @transform_1(%arg0: i32) -> (i32, i32) {
    %c0_i32 = arith.constant 0 : i32
    %c0_i32_0 = arith.constant 0 : i32
    %c0_i32_1 = arith.constant 0 : i32
    return %c0_i32, %c0_i32_0 : i32, i32
  }
  func.func @transform_2(%arg0: i32) -> (i32, i32) {
    %c0_i32 = arith.constant 0 : i32
    %c0_i32_0 = arith.constant 0 : i32
    %c0_i32_1 = arith.constant 0 : i32
    return %c0_i32, %c0_i32_0 : i32, i32
  }
  func.func @transform_3(%arg0: i32) -> (i32, i32) {
    %c0_i32 = arith.constant 0 : i32
    %c0_i32_0 = arith.constant 0 : i32
    %c0_i32_1 = arith.constant 0 : i32
    return %c0_i32, %c0_i32_0 : i32, i32
  }
  func.func @transform_4(%arg0: i32) -> (i32, i32) {
    %c0_i32 = arith.constant 0 : i32
    %c0_i32_0 = arith.constant 0 : i32
    %c0_i32_1 = arith.constant 0 : i32
    return %c0_i32, %c0_i32_0 : i32, i32
  }
  func.func @transform_5(%arg0: i32) -> (i32, i32, i32) {
    %c0_i32 = arith.constant 0 : i32
    %c0_i32_0 = arith.constant 0 : i32
    %c0_i32_1 = arith.constant 0 : i32
    %c0_i32_2 = arith.constant 0 : i32
    return %c0_i32, %c0_i32_0, %c0_i32_1 : i32, i32, i32
  }
  func.func @transform_6(%arg0: i32) -> (i32, i32) {
    %c0_i32 = arith.constant 0 : i32
    %c0_i32_0 = arith.constant 0 : i32
    %c0_i32_1 = arith.constant 0 : i32
    return %c0_i32, %c0_i32_0 : i32, i32
  }
  func.func @transform_7(%arg0: i32) -> (i32, i32) {
    %c0_i32 = arith.constant 0 : i32
    %c0_i32_0 = arith.constant 0 : i32
    %c0_i32_1 = arith.constant 0 : i32
    return %c0_i32, %c0_i32_0 : i32, i32
  }
  func.func @transform_8(%arg0: i32) -> (i32, i32) {
    %c0_i32 = arith.constant 0 : i32
    %c0_i32_0 = arith.constant 0 : i32
    %c0_i32_1 = arith.constant 0 : i32
    return %c0_i32, %c0_i32_0 : i32, i32
  }
  func.func @transform_9(%arg0: i32) -> (i32, i32, i32) {
    %c0_i32 = arith.constant 0 : i32
    %c0_i32_0 = arith.constant 0 : i32
    %c0_i32_1 = arith.constant 0 : i32
    return %arg0, %c0_i32, %c0_i32_0 : i32, i32, i32
  }
  func.func @transform_10(%arg0: i32) -> (i32, i32, i32) {
    %c0_i32 = arith.constant 0 : i32
    %c0_i32_0 = arith.constant 0 : i32
    %c0_i32_1 = arith.constant 0 : i32
    return %arg0, %c0_i32, %c0_i32_0 : i32, i32, i32
  }
}

</mosaic_0001>

<llo_original>
// kernel: tpu_custom_call.1
$region0: #{tpu_custom_call.1}
  #allocation0 [shape = 'u32[]', space=smem, size = 0x4, offset = 0x4, fixed_abs, tag = 'smem constant byte address 0x4 - core index']
  #allocation1 [shape = 'u32[72,128]{1,0:T(1,128)}', space=vmem, size = 0x9000, scoped, tag = 'internal scratch']
  %s0 = inlined_call_operand.vmem [shape: f32[4,8,64], index: 0, kind: input, shape index: {}]
  %s1 = inlined_call_operand.vmem [shape: f32[4,8], index: 1, kind: input, shape index: {}]
  %s2 = inlined_call_operand.vmem [shape: f32[4,1], index: 2, kind: input, shape index: {}]
  %s3 = inlined_call_operand.vmem [shape: f32[4,1], index: 3, kind: input, shape index: {}]
  %s4 = inlined_call_operand.vmem [shape: f32[4,1], index: 4, kind: input, shape index: {}]
  %s5 = inlined_call_operand.vmem [shape: f32[9,8,4], index: 5, kind: input, shape index: {}]
  %s6 = inlined_call_operand.vmem [shape: f32[8,1], index: 6, kind: input, shape index: {}]
  %s7 = inlined_call_operand.vmem [shape: f32[8,1], index: 7, kind: input, shape index: {}]
  %s8 = inlined_call_operand.vmem [shape: f32[8,1], index: 8, kind: input, shape index: {}]
  %s9 = inlined_call_operand.hbm [shape: f32[4,8,64], index: 9, kind: output, shape index: {0}]
  %s10 = inlined_call_operand.hbm [shape: f32[4,4,64], index: 10, kind: output, shape index: {1}]
  %11 = xla_tuple %s9, %s10
  %s12 = sld [smem:[#allocation0]]
  $region77: #{tpu_custom_call.1} parent=0
    _
  %s14 = ssub.s32 1, %s12
  %s15 = scalar_select 0, %s14, %s12
  $region1: #{tpu_custom_call.1} parent=0
    #allocation2 [shape = 'u8[16384]{0}', space=vmem, size = 0x4000, scoped, tag = 'output window, operand 0']
    #allocation3 [shape = 's32[2]{0}', space=sflag, size = 0x8, scoped, tag = 'scoped memory for tpu_custom_call.1']
    #allocation4 [shape = 'u8[8192]{0}', space=vmem, size = 0x2000, scoped, tag = 'output window, operand 1']
    #allocation5 [shape = 's32[2]{0}', space=sflag, size = 0x8, scoped, tag = 'scoped memory for tpu_custom_call.1']
    %16 = vsyncpa [#allocation3], 0
    %s17 = scalar_lea.sflag [#allocation3], 1
    %18 = vsyncpa %s17, 0
    %19 = vsyncpa [#allocation5], 0
    %s20 = scalar_lea.sflag [#allocation5], 1
    %21 = vsyncpa %s20, 0
    loop: start=0, step=1, limit=4
    $region2: #{tpu_custom_call.1} parent=1 // loop_pre_header
      _
    $region3: #{tpu_custom_call.1} parent=1 // loop_header
      %s23 = sphi 0, %s27
      %p24 = scmp.ge.s32.totalorder %s23, 4
      %s33 = sphi 0, %s35
      %s36 = sphi 0, %s33
      %s37 = sphi 0, %s36
      %s53 = sphi 0, %s37
      %s57 = sphi 0, %s57
      %s59 = sphi 0, %s57
      %s60 = sphi 0, %s59
      %s74 = sphi 0, %s60
      %s78 = sphi 0, %s78
      %s80 = sphi 0, %s78
      %s81 = sphi 0, %s80
      %s95 = sphi 0, %s81
      %s99 = sphi 0, %s99
      %s101 = sphi 0, %s99
      %s102 = sphi 0, %s101
      %s116 = sphi 0, %s102
      %s120 = sphi 0, %s120
      %s122 = sphi 0, %s120
      %s123 = sphi 0, %s122
      %s137 = sphi 0, %s123
      %s141 = sphi 0, %s141
      %s143 = sphi 0, %s141
      %s144 = sphi 0, %s143
      %s158 = sphi 0, %s144
      %s162 = sphi 0, %s162
      %s164 = sphi 0, %s162
      %s165 = sphi 0, %s164
      %s179 = sphi 0, %s165
      %s183 = sphi 0, %s183
      %s185 = sphi 0, %s183
      %s186 = sphi 0, %s185
      %s200 = sphi 0, %s186
      %s204 = sphi 0, %s204
      %s206 = sphi 0, %s204
      %s207 = sphi 0, %s206
      %s221 = sphi 0, %s207
      %s227 = sphi 0, %s229
      %s230 = sphi 0, %s227
      %s231 = sphi 0, %s230
      %s247 = sphi 0, %s231
      %s253 = sphi 0, %s255
      %s256 = sphi 0, %s253
      %s257 = sphi 0, %s256
      %s273 = sphi 0, %s257
    $region4: #{tpu_custom_call.1} parent=1 // loop_header_branch
      %26 = sbr.rel (%p24) target = $region8
    $region5: #{tpu_custom_call.1} parent=1 // loop_body
      %s28 = ssub.s32 %s23, 1
      %s29 = ssub.s32 %s23, 2
      %s30 = sadd.s32 %s23, 1
      %s31 = ssub.s32 %s23, %s30
      %p32 = scmp.eq.s32.totalorder %s31, 0
      %s34 = sadd.s32 %s33, 1
      %s35 = scalar_select %p32, %s33, %s34
      %p38 = pneg %p32
      %p39 = scmp.eq.s32.totalorder %s23, 1
      %p40 = por %p38, %p39
      %p41 = scmp.ne.s32.totalorder %s33, %s36
      %p42 = scmp.eq.s32.totalorder %s23, 0
      %p43 = por %p41, %p42
      %p44 = scmp.ne.s32.totalorder %s33, %s36
      %p45 = scmp.eq.s32.totalorder %s28, 1
      %p46 = por %p44, %p45
      %p47 = scmp.ne.s32.totalorder %s36, %s37
      %p48 = scmp.eq.s32.totalorder %s28, 0
      %p49 = por %p47, %p48
      %p50 = scmp.ne.s32.totalorder %s36, %s37
      %p51 = scmp.eq.s32.totalorder %s29, 1
      %p52 = por %p50, %p51
      %p54 = scmp.ne.s32.totalorder %s37, %s53
      %p55 = scmp.eq.s32.totalorder %s29, 0
      %p56 = por %p54, %p55
      %s58 = sadd.s32 %s57, 1
      %p61 = scmp.eq.s32.totalorder %s23, 1
      %p62 = scmp.ne.s32.totalorder %s57, %s59
      %p63 = scmp.eq.s32.totalorder %s23, 0
      %p64 = por %p62, %p63
      %p65 = scmp.ne.s32.totalorder %s57, %s59
      %p66 = scmp.eq.s32.totalorder %s28, 1
      %p67 = por %p65, %p66
      %p68 = scmp.ne.s32.totalorder %s59, %s60
      %p69 = scmp.eq.s32.totalorder %s28, 0
      %p70 = por %p68, %p69
      %p71 = scmp.ne.s32.totalorder %s59, %s60
      %p72 = scmp.eq.s32.totalorder %s29, 1
      %p73 = por %p71, %p72
      %p75 = scmp.ne.s32.totalorder %s60, %s74
      %p76 = scmp.eq.s32.totalorder %s29, 0
      %p77 = por %p75, %p76
      %s79 = sadd.s32 %s78, 1
      %p82 = scmp.eq.s32.totalorder %s23, 1
      %p83 = scmp.ne.s32.totalorder %s78, %s80
      %p84 = scmp.eq.s32.totalorder %s23, 0
      %p85 = por %p83, %p84
      %p86 = scmp.ne.s32.totalorder %s78, %s80
      %p87 = scmp.eq.s32.totalorder %s28, 1
      %p88 = por %p86, %p87
      %p89 = scmp.ne.s32.totalorder %s80, %s81
      %p90 = scmp.eq.s32.totalorder %s28, 0
      %p91 = por %p89, %p90
      %p92 = scmp.ne.s32.totalorder %s80, %s81
      %p93 = scmp.eq.s32.totalorder %s29, 1
      %p94 = por %p92, %p93
      %p96 = scmp.ne.s32.totalorder %s81, %s95
      %p97 = scmp.eq.s32.totalorder %s29, 0
      %p98 = por %p96, %p97
      %s100 = sadd.s32 %s99, 1
      %p103 = scmp.eq.s32.totalorder %s23, 1
      %p104 = scmp.ne.s32.totalorder %s99, %s101
      %p105 = scmp.eq.s32.totalorder %s23, 0
      %p106 = por %p104, %p105
      %p107 = scmp.ne.s32.totalorder %s99, %s101
      %p108 = scmp.eq.s32.totalorder %s28, 1
      %p109 = por %p107, %p108
      %p110 = scmp.ne.s32.totalorder %s101, %s102
      %p111 = scmp.eq.s32.totalorder %s28, 0
      %p112 = por %p110, %p111
      %p113 = scmp.ne.s32.totalorder %s101, %s102
      %p114 = scmp.eq.s32.totalorder %s29, 1
      %p115 = por %p113, %p114
      %p117 = scmp.ne.s32.totalorder %s102, %s116
      %p118 = scmp.eq.s32.totalorder %s29, 0
      %p119 = por %p117, %p118
      %s121 = sadd.s32 %s120, 1
      %p124 = scmp.eq.s32.totalorder %s23, 1
      %p125 = scmp.ne.s32.totalorder %s120, %s122
      %p126 = scmp.eq.s32.totalorder %s23, 0
      %p127 = por %p125, %p126
      %p128 = scmp.ne.s32.totalorder %s120, %s122
      %p129 = scmp.eq.s32.totalorder %s28, 1
      %p130 = por %p128, %p129
      %p131 = scmp.ne.s32.totalorder %s122, %s123
      %p132 = scmp.eq.s32.totalorder %s28, 0
      %p133 = por %p131, %p132
      %p134 = scmp.ne.s32.totalorder %s122, %s123
      %p135 = scmp.eq.s32.totalorder %s29, 1
      %p136 = por %p134, %p135
      %p138 = scmp.ne.s32.totalorder %s123, %s137
      %p139 = scmp.eq.s32.totalorder %s29, 0
      %p140 = por %p138, %p139
      %s142 = sadd.s32 %s141, 1
      %p145 = scmp.eq.s32.totalorder %s23, 1
      %p146 = scmp.ne.s32.totalorder %s141, %s143
      %p147 = scmp.eq.s32.totalorder %s23, 0
      %p148 = por %p146, %p147
      %p149 = scmp.ne.s32.totalorder %s141, %s143
      %p150 = scmp.eq.s32.totalorder %s28, 1
      %p151 = por %p149, %p150
      %p152 = scmp.ne.s32.totalorder %s143, %s144
      %p153 = scmp.eq.s32.totalorder %s28, 0
      %p154 = por %p152, %p153
      %p155 = scmp.ne.s32.totalorder %s143, %s144
      %p156 = scmp.eq.s32.totalorder %s29, 1
      %p157 = por %p155, %p156
      %p159 = scmp.ne.s32.totalorder %s144, %s158
      %p160 = scmp.eq.s32.totalorder %s29, 0
      %p161 = por %p159, %p160
      %s163 = sadd.s32 %s162, 1
      %p166 = scmp.eq.s32.totalorder %s23, 1
      %p167 = scmp.ne.s32.totalorder %s162, %s164
      %p168 = scmp.eq.s32.totalorder %s23, 0
      %p169 = por %p167, %p168
      %p170 = scmp.ne.s32.totalorder %s162, %s164
      %p171 = scmp.eq.s32.totalorder %s28, 1
      %p172 = por %p170, %p171
      %p173 = scmp.ne.s32.totalorder %s164, %s165
      %p174 = scmp.eq.s32.totalorder %s28, 0
      %p175 = por %p173, %p174
      %p176 = scmp.ne.s32.totalorder %s164, %s165
      %p177 = scmp.eq.s32.totalorder %s29, 1
      %p178 = por %p176, %p177
      %p180 = scmp.ne.s32.totalorder %s165, %s179
      %p181 = scmp.eq.s32.totalorder %s29, 0
      %p182 = por %p180, %p181
      %s184 = sadd.s32 %s183, 1
      %p187 = scmp.eq.s32.totalorder %s23, 1
      %p188 = scmp.ne.s32.totalorder %s183, %s185
      %p189 = scmp.eq.s32.totalorder %s23, 0
      %p190 = por %p188, %p189
      %p191 = scmp.ne.s32.totalorder %s183, %s185
      %p192 = scmp.eq.s32.totalorder %s28, 1
      %p193 = por %p191, %p192
      %p194 = scmp.ne.s32.totalorder %s185, %s186
      %p195 = scmp.eq.s32.totalorder %s28, 0
      %p196 = por %p194, %p195
      %p197 = scmp.ne.s32.totalorder %s185, %s186
      %p198 = scmp.eq.s32.totalorder %s29, 1
      %p199 = por %p197, %p198
      %p201 = scmp.ne.s32.totalorder %s186, %s200
      %p202 = scmp.eq.s32.totalorder %s29, 0
      %p203 = por %p201, %p202
      %s205 = sadd.s32 %s204, 1
      %p208 = scmp.eq.s32.totalorder %s23, 1
      %p209 = scmp.ne.s32.totalorder %s204, %s206
      %p210 = scmp.eq.s32.totalorder %s23, 0
      %p211 = por %p209, %p210
      %p212 = scmp.ne.s32.totalorder %s204, %s206
      %p213 = scmp.eq.s32.totalorder %s28, 1
      %p214 = por %p212, %p213
      %p215 = scmp.ne.s32.totalorder %s206, %s207
      %p216 = scmp.eq.s32.totalorder %s28, 0
      %p217 = por %p215, %p216
      %p218 = scmp.ne.s32.totalorder %s206, %s207
      %p219 = scmp.eq.s32.totalorder %s29, 1
      %p220 = por %p218, %p219
      %p222 = scmp.ne.s32.totalorder %s207, %s221
      %p223 = scmp.eq.s32.totalorder %s29, 0
      %p224 = por %p222, %p223
      %s225 = ssub.s32 %s23, %s30
      %p226 = scmp.eq.s32.totalorder %s225, 0
      %s228 = sadd.s32 %s227, 1
      %s229 = scalar_select %p226, %s227, %s228
      %p232 = pneg %p226
      %p233 = scmp.eq.s32.totalorder %s23, 1
      %p234 = por %p232, %p233
      %p235 = scmp.ne.s32.totalorder %s227, %s230
      %p236 = scmp.eq.s32.totalorder %s23, 0
      %p237 = por %p235, %p236
      %p238 = scmp.ne.s32.totalorder %s227, %s230
      %p239 = scmp.eq.s32.totalorder %s28, 1
      %p240 = por %p238, %p239
      %p241 = scmp.ne.s32.totalorder %s230, %s231
      %p242 = scmp.eq.s32.totalorder %s28, 0
      %p243 = por %p241, %p242
      %p244 = scmp.ne.s32.totalorder %s230, %s231
      %p245 = scmp.eq.s32.totalorder %s29, 1
      %p246 = por %p244, %p245
      %p248 = scmp.ne.s32.totalorder %s231, %s247
      %p249 = scmp.eq.s32.totalorder %s29, 0
      %p250 = por %p248, %p249
      %s251 = ssub.s32 %s23, %s30
      %p252 = scmp.eq.s32.totalorder %s251, 0
      %s254 = sadd.s32 %s253, 1
      %s255 = scalar_select %p252, %s253, %s254
      %p258 = pneg %p252
      %p259 = scmp.eq.s32.totalorder %s23, 1
      %p260 = por %p258, %p259
      %p261 = scmp.ne.s32.totalorder %s253, %s256
      %p262 = scmp.eq.s32.totalorder %s23, 0
      %p263 = por %p261, %p262
      %p264 = scmp.ne.s32.totalorder %s253, %s256
      %p265 = scmp.eq.s32.totalorder %s28, 1
      %p266 = por %p264, %p265
      %p267 = scmp.ne.s32.totalorder %s256, %s257
      %p268 = scmp.eq.s32.totalorder %s28, 0
      %p269 = por %p267, %p268
      %p270 = scmp.ne.s32.totalorder %s256, %s257
      %p271 = scmp.eq.s32.totalorder %s29, 1
      %p272 = por %p270, %p271
      %p274 = scmp.ne.s32.totalorder %s257, %s273
      %p275 = scmp.eq.s32.totalorder %s29, 0
      %p276 = por %p274, %p275
      %p277 = scmp.le.s32.totalorder 1, %s23
      %p278 = scmp.lt.s32.totalorder %s23, 3
      %p279 = pnand %p277, %p278
      %p280 = pneg %p279
      // Predicated region
      $region9: #{tpu_custom_call.1} parent=5 // pred_check
        _
      $region10: #{tpu_custom_call.1} parent=5 // pred_check_branch
        %282 = sbr.rel (%p279) target = $region12
      $region11: #{tpu_custom_call.1} parent=5 // pred_region
        %s283 = ssub.s32 %s23, 1
        // Predicated region
        $region13: #{tpu_custom_call.1} parent=11 // pred_check
          %p284 = pneg %p70
        $region14: #{tpu_custom_call.1} parent=11 // pred_check_branch
          %286 = sbr.rel (%p284) target = $region16
        $region15: #{tpu_custom_call.1} parent=11 // pred_region
          _
        $region16: #{tpu_custom_call.1} parent=11 // pred_fallthru
          _
        // Predicated region
        $region17: #{tpu_custom_call.1} parent=11 // pred_check
          %p287 = pneg %p91
        $region18: #{tpu_custom_call.1} parent=11 // pred_check_branch
          %289 = sbr.rel (%p287) target = $region20
        $region19: #{tpu_custom_call.1} parent=11 // pred_region
          _
        $region20: #{tpu_custom_call.1} parent=11 // pred_fallthru
          _
        // Predicated region
        $region21: #{tpu_custom_call.1} parent=11 // pred_check
          %p290 = pneg %p112
        $region22: #{tpu_custom_call.1} parent=11 // pred_check_branch
          %292 = sbr.rel (%p290) target = $region24
        $region23: #{tpu_custom_call.1} parent=11 // pred_region
          _
        $region24: #{tpu_custom_call.1} parent=11 // pred_fallthru
          _
        // Predicated region
        $region25: #{tpu_custom_call.1} parent=11 // pred_check
          %p293 = pneg %p133
        $region26: #{tpu_custom_call.1} parent=11 // pred_check_branch
          %295 = sbr.rel (%p293) target = $region28
        $region27: #{tpu_custom_call.1} parent=11 // pred_region
          _
        $region28: #{tpu_custom_call.1} parent=11 // pred_fallthru
          _
        // Predicated region
        $region29: #{tpu_custom_call.1} parent=11 // pred_check
          %p296 = pneg %p154
        $region30: #{tpu_custom_call.1} parent=11 // pred_check_branch
          %298 = sbr.rel (%p296) target = $region32
        $region31: #{tpu_custom_call.1} parent=11 // pred_region
          _
        $region32: #{tpu_custom_call.1} parent=11 // pred_fallthru
          _
        // Predicated region
        $region33: #{tpu_custom_call.1} parent=11 // pred_check
          %p299 = pneg %p175
        $region34: #{tpu_custom_call.1} parent=11 // pred_check_branch
          %301 = sbr.rel (%p299) target = $region36
        $region35: #{tpu_custom_call.1} parent=11 // pred_region
          _
        $region36: #{tpu_custom_call.1} parent=11 // pred_fallthru
          _
        // Predicated region
        $region37: #{tpu_custom_call.1} parent=11 // pred_check
          %p302 = pneg %p196
        $region38: #{tpu_custom_call.1} parent=11 // pred_check_branch
          %304 = sbr.rel (%p302) target = $region40
        $region39: #{tpu_custom_call.1} parent=11 // pred_region
          _
        $region40: #{tpu_custom_call.1} parent=11 // pred_fallthru
          _
        // Predicated region
        $region41: #{tpu_custom_call.1} parent=11 // pred_check
          %p305 = pneg %p217
        $region42: #{tpu_custom_call.1} parent=11 // pred_check_branch
          %307 = sbr.rel (%p305) target = $region44
        $region43: #{tpu_custom_call.1} parent=11 // pred_region
          _
        $region44: #{tpu_custom_call.1} parent=11 // pred_fallthru
          _
      $region12: #{tpu_custom_call.1} parent=5 // pred_fallthru
        _
      %p308 = scmp.lt.s32.totalorder %s23, 2
      // Predicated region
      $region45: #{tpu_custom_call.1} parent=5 // pred_check
        %p309 = pneg %p308
      $region46: #{tpu_custom_call.1} parent=5 // pred_check_branch
        %311 = sbr.rel (%p309) target = $region48
      $region47: #{tpu_custom_call.1} parent=5 // pred_region
        // Predicated region
        $region49: #{tpu_custom_call.1} parent=47 // pred_check
          %p312 = pneg %p43
        $region50: #{tpu_custom_call.1} parent=47 // pred_check_branch
          %314 = sbr.rel (%p312) target = $region52
        $region51: #{tpu_custom_call.1} parent=47 // pred_region
          %s315 = smul.u32 2, %s23
          %p316 = scmp.lt.s32.totalorder %s315, 3
          %s317 = scalar_select %p316, %s315, 3
          %s318 = smul.addr %s317, 8
          %s319 = scalar_lea.vmem %s0, %s318
          %s320 = smul.u32 2, %s23
        $region52: #{tpu_custom_call.1} parent=47 // pred_fallthru
          _
      $region48: #{tpu_custom_call.1} parent=5 // pred_fallthru
        _
      %p321 = scmp.le.s32.totalorder 1, %s23
      %p322 = scmp.lt.s32.totalorder %s23, 3
      %p323 = pnand %p321, %p322
      %p324 = pneg %p323
      // Predicated region
      $region53: #{tpu_custom_call.1} parent=5 // pred_check
        _
      $region54: #{tpu_custom_call.1} parent=5 // pred_check_branch
        %326 = sbr.rel (%p323) target = $region56
      $region55: #{tpu_custom_call.1} parent=5 // pred_region
        %s327 = ssub.s32 %s23, 1
        %s328 = smul.u32 2, %s28
        %p329 = scmp.lt.s32.totalorder %s328, 3
        %s330 = scalar_select %p329, %s328, 3
        %s331 = smul.addr %s330, 8
        %s332 = scalar_lea.vmem %s0, %s331
        %p333 = pneg %p49
        %p334 = pneg %p46
        %p335 = pneg %p70
        %p336 = pneg %p67
        %p337 = pneg %p91
        %p338 = pneg %p88
        %p339 = pneg %p112
        %p340 = pneg %p109
        %p341 = pneg %p133
        %p342 = pneg %p130
        %p343 = pneg %p154
        %p344 = pneg %p151
        %p345 = pneg %p175
        %p346 = pneg %p172
        %p347 = pneg %p196
        %p348 = pneg %p193
        %p349 = pneg %p217
        %p350 = pneg %p214
        %p351 = pneg %p243
        %p352 = pneg %p240
        %s353 = sand.u32 %s230, 1
        %s354 = scalar_lea.sflag [#allocation3], %s353
        %s355 = sand.u32 %s230, 1
        %s356 = smul.addr %s355, 16
        %s357 = scalar_lea.vmem [#allocation2], %s356
        %p358 = pneg %p269
        %p359 = pneg %p266
        %s360 = sand.u32 %s256, 1
        %s361 = scalar_lea.sflag [#allocation5], %s360
        %s362 = sand.u32 %s256, 1
        %s363 = smul.addr %s362, 8
        %s364 = scalar_lea.vmem [#allocation4], %s363
        %s365 = smul.u32 2, %s28
        %p366 = scmp.lt.s32.totalorder %s365, 3
        %s367 = scalar_select %p366, %s365, 3
        %s368 = smul.addr %s367, 8
        %s369 = scalar_lea.vmem %s0, %s368
        %s370 = smul.u32 2, %s28
        %s371 = smul.u32 2, %s28
        %s372 = smul.u32 2, %s28
        %v373 = vlaneseq
        %v374 = vand.u32 %v373, 127
        %vm375 = vcmp.lt.s32.totalorder %v374, 0
        %v376 = vsub.s32 0, %v374
        %v377 = vsel %vm375, %v376, %v374
        %v378 = vshrl.u32 %v377, 3
        %v379 = vand.u32 %v377, 7
        %v380 = vsub.s32 0, %v379
        %v381 = vsel %vm375, %v380, %v379
        %vm382 = vcmp.ne.s32.totalorder %v381, 0
        %vm383 = vcmp.lt.s32.totalorder %v381, 0
        %vm384 = vmand %vm383, %vm382
        %v385 = vadd.s32 %v381, 8
        %v386 = vsel %vm384, %v385, %v381
        %vm387 = vcmp.ge.s32.totalorder %v374, 8
        %vm388 = vcmp.lt.s32.totalorder %v374, 56
        %vm389 = vcmp.ge.s32.totalorder %v386, 1
        %vm390 = vcmp.le.s32.totalorder %v386, 6
        %vm391 = vmand %vm387, %vm389
        %vm392 = vmand %vm387, %vm390
        %vm393 = vmand %vm388, %vm389
        %vm394 = vmand %vm388, %vm390
        %v395 = vld [vmem:[%s1] sm:$0xf]
        %v396 = vld [vmem:[%s2] sm:$0xf]
        %v397 = vld [vmem:[%s3] sm:$0xf]
        %v398 = vld [vmem:[%s4] sm:$0xf]
        %v399 = vld [vmem:[%s5] sm:$0xff]
        %v400 = vld [vmem:[%s5 + $0x8] sm:$0xff]
        %v401 = vld [vmem:[%s5 + $0x10] sm:$0xff]
        %v402 = vld [vmem:[%s5 + $0x18] sm:$0xff]
        %v403 = vld [vmem:[%s5 + $0x20] sm:$0xff]
        %v404 = vld [vmem:[%s5 + $0x28] sm:$0xff]
        %v405 = vld [vmem:[%s5 + $0x30] sm:$0xff]
        %v406 = vld [vmem:[%s5 + $0x38] sm:$0xff]
        %v407 = vld [vmem:[%s5 + $0x40] sm:$0xff]
        %v408 = vld [vmem:[%s6] sm:$0xff]
        %v409 = vld [vmem:[%s7] sm:$0xff]
        %v410 = vld [vmem:[%s8] sm:$0xff]
        %v411 = vld [vmem:[%s369] sm:$0xff]
        %vm412 = vcmask 64512
        %v414 = vsel %vm412, %v395, 0
        %416 = vmatpush.msra.mxu0 0.0
        %417 = vmatpush.msra.mxu0 0.0
        %418 = vmatpush.msra.mxu0 0.0
        %419 = vmatpush.msra.mxu0 0.0
        %420 = vmatpush.msra.mxu0 0.0
        %421 = vmatpush.msra.mxu0 0.0
        %422 = vmatpush.msra.mxu0 0.0
        %423 = vmatpush.msra.mxu0 0.0
        %424 = vmatpush.msra.mxu0 0.0
        %425 = vmatpush.msra.mxu0 0.0
        %426 = vmatpush.msra.mxu0 0.0
        %427 = vmatpush.msra.mxu0 0.0
        %428 = vmatpush.msra.mxu0 0.0
        %429 = vmatpush.msra.mxu0 0.0
        %430 = vmatpush.msra.mxu0 0.0
        %431 = vmatpush.msra.mxu0 %v411
        %432 = vmatmul.f32.gmra.mxu0 %v414
        %v433 = vpop.f32.mrf.mxu0
        %v434 = vadd.f32 0.0, %v433
        %435 = vdwg.mxu0
        %vm436 = vcmask 519168
        %v437 = vsel %vm436, %v434, 0.0
        %438 = vadd.xlane.f32.xlu0 %v437
        %v439 = vpop.xlane.xlu0 %438
        %v440 = vmul.f32 %v439, 0.015625
        %v441 = vmul.f32 %v434, %v434
        %v442 = vsel %vm436, %v441, 0.0
        %443 = vadd.xlane.f32.xlu0 %v442
        %v444 = vpop.xlane.xlu0 %443
        %v445 = vmul.f32 %v444, 0.015625
        %v446 = vmul.f32 %v440, %v440
        %v447 = vsub.f32 %v445, %v446
        %v448 = vmax.f32 %v447, 0.0
        %v449 = vsub.f32 %v434, %v440
        %v450 = vadd.f32 %v448, 1e-05
        %v451 = vrsqrt.pop %v450
        %v452 = vmul.f32 %v451, %v450
        %v453 = vmul.f32 %v452, %v451
        %v454 = vmul.f32 0.5, %v453
        %v455 = vsub.f32 1.5, %v454
        %v456 = vmul.f32 %v451, %v455
        %vm457 = vweird.f32 %v450
        %vm458 = vweird.f32 %v451
        %vm459 = vmor %vm457, %vm458
        %v460 = vsel %vm459, %v451, %v456
        %v461 = vmul.f32 %v449, %v460
        %463 = vset.pattern.permute.xlu0 0
        %464 = vperm.xlu0 %463, %v396
        %v465 = vpop.permute.xlu0 %464
        %v467 = vmul.f32 %v461, %v465
        %469 = vset.pattern.permute.xlu0 0
        %470 = vperm.xlu0 %469, %v397
        %v471 = vpop.permute.xlu0 %470
        %v473 = vadd.f32 %v467, %v471
        %vm474 = vcmp.ge.f32.partialorder %v473, 0.0
        %476 = vset.pattern.permute.xlu0 0
        %477 = vperm.xlu0 %476, %v398
        %v478 = vpop.permute.xlu0 %477
        %v480 = vmul.f32 %v478, %v473
        %v481 = vsel %vm474, %v473, %v480
        %482 = vst.msk [vmem:[%s364] sm:$0xf] %vm436, %v481
        %484 = vrot.lane.b32.xlu0 %v481, 73
        %v485 = vpop.permute.xlu0 %484
        %487 = vrot.lane.b32.xlu0 %v481, 9
        %v488 = vpop.permute.xlu0 %487
        %vm490 = vcmask 72704
        %v491 = vsel %vm490, %v485, %v488
        %v492 = vsel %vm391, 1, 0
        %vm493 = vcmp.eq.s32.totalorder %v492, 1
        %v494 = vsel %vm493, %v491, 0.0
        %495 = vrot.lane.b32.xlu0 %v481, 72
        %v496 = vpop.permute.xlu0 %495
        %498 = vrot.lane.b32.xlu0 %v481, 8
        %v499 = vpop.permute.xlu0 %498
        %v501 = vsel %vm412, %v496, %v499
        %v502 = vsel %vm387, 1, 0
        %vm503 = vcmp.eq.s32.totalorder %v502, 1
        %v504 = vsel %vm503, %v501, 0.0
        %vm505 = vcmask 31744
        %v507 = vsel %vm505, %v400, 0
        %vm509 = vcmask 1043456
        %v511 = vsel %vm509, %v504, 0
        %513 = vmatpush.msra.mxu0 0.0
        %514 = vmatpush.msra.mxu0 0.0
        %515 = vmatpush.msra.mxu0 0.0
        %516 = vmatpush.msra.mxu0 0.0
        %517 = vmatpush.msra.mxu0 0.0
        %518 = vmatpush.msra.mxu0 0.0
        %519 = vmatpush.msra.mxu0 0.0
        %520 = vmatpush.msra.mxu0 0.0
        %521 = vmatpush.msra.mxu0 0.0
        %522 = vmatpush.msra.mxu0 0.0
        %523 = vmatpush.msra.mxu0 0.0
        %524 = vmatpush.msra.mxu0 0.0
        %525 = vmatpush.msra.mxu0 0.0
        %526 = vmatpush.msra.mxu0 0.0
        %527 = vmatpush.msra.mxu0 0.0
        %528 = vmatpush.msra.mxu0 %v511
        %529 = vmatmul.f32.gmra.mxu0 %v507
        %v530 = vpop.f32.mrf.mxu0
        %v531 = vadd.f32 0.0, %v530
        %532 = vdwg.mxu0
        %v534 = vsel %vm505, %v399, 0
        %v537 = vsel %vm509, %v494, 0
        %539 = vmatpush.msra.mxu0 0.0
        %540 = vmatpush.msra.mxu0 0.0
        %541 = vmatpush.msra.mxu0 0.0
        %542 = vmatpush.msra.mxu0 0.0
        %543 = vmatpush.msra.mxu0 0.0
        %544 = vmatpush.msra.mxu0 0.0
        %545 = vmatpush.msra.mxu0 0.0
        %546 = vmatpush.msra.mxu0 0.0
        %547 = vmatpush.msra.mxu0 0.0
        %548 = vmatpush.msra.mxu0 0.0
        %549 = vmatpush.msra.mxu0 0.0
        %550 = vmatpush.msra.mxu0 0.0
        %551 = vmatpush.msra.mxu0 0.0
        %552 = vmatpush.msra.mxu0 0.0
        %553 = vmatpush.msra.mxu0 0.0
        %554 = vmatpush.msra.mxu0 %v537
        %555 = vmatmul.f32.gmra.mxu0 %v534
        %v556 = vpop.f32.mrf.mxu0
        %v557 = vadd.f32 %v531, %v556
        %558 = vdwg.mxu0
        %559 = vrot.lane.b32.xlu0 %v481, 71
        %v560 = vpop.permute.xlu0 %559
        %562 = vrot.lane.b32.xlu0 %v481, 7
        %v563 = vpop.permute.xlu0 %562
        %vm565 = vcmask 56320
        %v566 = vsel %vm565, %v560, %v563
        %v567 = vsel %vm392, 1, 0
        %vm568 = vcmp.eq.s32.totalorder %v567, 1
        %v569 = vsel %vm568, %v566, 0.0
        %v571 = vsel %vm505, %v401, 0
        %v574 = vsel %vm509, %v569, 0
        %576 = vmatpush.msra.mxu0 0.0
        %577 = vmatpush.msra.mxu0 0.0
        %578 = vmatpush.msra.mxu0 0.0
        %579 = vmatpush.msra.mxu0 0.0
        %580 = vmatpush.msra.mxu0 0.0
        %581 = vmatpush.msra.mxu0 0.0
        %582 = vmatpush.msra.mxu0 0.0
        %583 = vmatpush.msra.mxu0 0.0
        %584 = vmatpush.msra.mxu0 0.0
        %585 = vmatpush.msra.mxu0 0.0
        %586 = vmatpush.msra.mxu0 0.0
        %587 = vmatpush.msra.mxu0 0.0
        %588 = vmatpush.msra.mxu0 0.0
        %589 = vmatpush.msra.mxu0 0.0
        %590 = vmatpush.msra.mxu0 0.0
        %591 = vmatpush.msra.mxu0 %v574
        %592 = vmatmul.f32.gmra.mxu0 %v571
        %v593 = vpop.f32.mrf.mxu0
        %v594 = vadd.f32 0.0, %v593
        %595 = vdwg.mxu0
        %v596 = vadd.f32 %v557, %v594
        %597 = vrot.lane.b32.xlu0 %v481, 65
        %v598 = vpop.permute.xlu0 %597
        %600 = vrot.lane.b32.xlu0 %v481, 1
        %v601 = vpop.permute.xlu0 %600
        %vm603 = vcmask 7168
        %v604 = vsel %vm603, %v598, %v601
        %v605 = vsel %vm389, 1, 0
        %vm606 = vcmp.eq.s32.totalorder %v605, 1
        %v607 = vsel %vm606, %v604, 0.0
        %v609 = vsel %vm505, %v402, 0
        %v612 = vsel %vm509, %v607, 0
        %614 = vmatpush.msra.mxu0 0.0
        %615 = vmatpush.msra.mxu0 0.0
        %616 = vmatpush.msra.mxu0 0.0
        %617 = vmatpush.msra.mxu0 0.0
        %618 = vmatpush.msra.mxu0 0.0
        %619 = vmatpush.msra.mxu0 0.0
        %620 = vmatpush.msra.mxu0 0.0
        %621 = vmatpush.msra.mxu0 0.0
        %622 = vmatpush.msra.mxu0 0.0
        %623 = vmatpush.msra.mxu0 0.0
        %624 = vmatpush.msra.mxu0 0.0
        %625 = vmatpush.msra.mxu0 0.0
        %626 = vmatpush.msra.mxu0 0.0
        %627 = vmatpush.msra.mxu0 0.0
        %628 = vmatpush.msra.mxu0 0.0
        %629 = vmatpush.msra.mxu0 %v612
        %630 = vmatmul.f32.gmra.mxu0 %v609
        %v631 = vpop.f32.mrf.mxu0
        %v632 = vadd.f32 0.0, %v631
        %633 = vdwg.mxu0
        %v634 = vadd.f32 %v596, %v632
        %v636 = vsel %vm505, %v403, 0
        %v638 = vsel %vm509, %v481, 0
        %640 = vmatpush.msra.mxu0 0.0
        %641 = vmatpush.msra.mxu0 0.0
        %642 = vmatpush.msra.mxu0 0.0
        %643 = vmatpush.msra.mxu0 0.0
        %644 = vmatpush.msra.mxu0 0.0
        %645 = vmatpush.msra.mxu0 0.0
        %646 = vmatpush.msra.mxu0 0.0
        %647 = vmatpush.msra.mxu0 0.0
        %648 = vmatpush.msra.mxu0 0.0
        %649 = vmatpush.msra.mxu0 0.0
        %650 = vmatpush.msra.mxu0 0.0
        %651 = vmatpush.msra.mxu0 0.0
        %652 = vmatpush.msra.mxu0 0.0
        %653 = vmatpush.msra.mxu0 0.0
        %654 = vmatpush.msra.mxu0 0.0
        %655 = vmatpush.msra.mxu0 %v638
        %656 = vmatmul.f32.gmra.mxu0 %v636
        %v657 = vpop.f32.mrf.mxu0
        %v658 = vadd.f32 0.0, %v657
        %659 = vdwg.mxu0
        %v660 = vadd.f32 %v634, %v658
        %661 = vrot.lane.b32.xlu0 %v481, 127
        %v662 = vpop.permute.xlu0 %661
        %664 = vrot.lane.b32.xlu0 %v481, 63
        %v665 = vpop.permute.xlu0 %664
        %vm667 = vcmask 515072
        %v668 = vsel %vm667, %v662, %v665
        %v669 = vsel %vm390, 1, 0
        %vm670 = vcmp.eq.s32.totalorder %v669, 1
        %v671 = vsel %vm670, %v668, 0.0
        %v673 = vsel %vm505, %v404, 0
        %v676 = vsel %vm509, %v671, 0
        %678 = vmatpush.msra.mxu0 0.0
        %679 = vmatpush.msra.mxu0 0.0
        %680 = vmatpush.msra.mxu0 0.0
        %681 = vmatpush.msra.mxu0 0.0
        %682 = vmatpush.msra.mxu0 0.0
        %683 = vmatpush.msra.mxu0 0.0
        %684 = vmatpush.msra.mxu0 0.0
        %685 = vmatpush.msra.mxu0 0.0
        %686 = vmatpush.msra.mxu0 0.0
        %687 = vmatpush.msra.mxu0 0.0
        %688 = vmatpush.msra.mxu0 0.0
        %689 = vmatpush.msra.mxu0 0.0
        %690 = vmatpush.msra.mxu0 0.0
        %691 = vmatpush.msra.mxu0 0.0
        %692 = vmatpush.msra.mxu0 0.0
        %693 = vmatpush.msra.mxu0 %v676
        %694 = vmatmul.f32.gmra.mxu0 %v673
        %v695 = vpop.f32.mrf.mxu0
        %v696 = vadd.f32 0.0, %v695
        %697 = vdwg.mxu0
        %v698 = vadd.f32 %v660, %v696
        %699 = vrot.lane.b32.xlu0 %v481, 121
        %v700 = vpop.permute.xlu0 %699
        %702 = vrot.lane.b32.xlu0 %v481, 57
        %v703 = vpop.permute.xlu0 %702
        %vm705 = vcmask 465920
        %v706 = vsel %vm705, %v700, %v703
        %v707 = vsel %vm393, 1, 0
        %vm708 = vcmp.eq.s32.totalorder %v707, 1
        %v709 = vsel %vm708, %v706, 0.0
        %v711 = vsel %vm505, %v405, 0
        %v714 = vsel %vm509, %v709, 0
        %716 = vmatpush.msra.mxu0 0.0
        %717 = vmatpush.msra.mxu0 0.0
        %718 = vmatpush.msra.mxu0 0.0
        %719 = vmatpush.msra.mxu0 0.0
        %720 = vmatpush.msra.mxu0 0.0
        %721 = vmatpush.msra.mxu0 0.0
        %722 = vmatpush.msra.mxu0 0.0
        %723 = vmatpush.msra.mxu0 0.0
        %724 = vmatpush.msra.mxu0 0.0
        %725 = vmatpush.msra.mxu0 0.0
        %726 = vmatpush.msra.mxu0 0.0
        %727 = vmatpush.msra.mxu0 0.0
        %728 = vmatpush.msra.mxu0 0.0
        %729 = vmatpush.msra.mxu0 0.0
        %730 = vmatpush.msra.mxu0 0.0
        %731 = vmatpush.msra.mxu0 %v714
        %732 = vmatmul.f32.gmra.mxu0 %v711
        %v733 = vpop.f32.mrf.mxu0
        %v734 = vadd.f32 0.0, %v733
        %735 = vdwg.mxu0
        %v736 = vadd.f32 %v698, %v734
        %737 = vrot.lane.b32.xlu0 %v481, 120
        %v738 = vpop.permute.xlu0 %737
        %740 = vrot.lane.b32.xlu0 %v481, 56
        %v741 = vpop.permute.xlu0 %740
        %vm743 = vcmask 457728
        %v744 = vsel %vm743, %v738, %v741
        %v745 = vsel %vm388, 1, 0
        %vm746 = vcmp.eq.s32.totalorder %v745, 1
        %v747 = vsel %vm746, %v744, 0.0
        %v749 = vsel %vm505, %v406, 0
        %v752 = vsel %vm509, %v747, 0
        %754 = vmatpush.msra.mxu0 0.0
        %755 = vmatpush.msra.mxu0 0.0
        %756 = vmatpush.msra.mxu0 0.0
        %757 = vmatpush.msra.mxu0 0.0
        %758 = vmatpush.msra.mxu0 0.0
        %759 = vmatpush.msra.mxu0 0.0
        %760 = vmatpush.msra.mxu0 0.0
        %761 = vmatpush.msra.mxu0 0.0
        %762 = vmatpush.msra.mxu0 0.0
        %763 = vmatpush.msra.mxu0 0.0
        %764 = vmatpush.msra.mxu0 0.0
        %765 = vmatpush.msra.mxu0 0.0
        %766 = vmatpush.msra.mxu0 0.0
        %767 = vmatpush.msra.mxu0 0.0
        %768 = vmatpush.msra.mxu0 0.0
        %769 = vmatpush.msra.mxu0 %v752
        %770 = vmatmul.f32.gmra.mxu0 %v749
        %v771 = vpop.f32.mrf.mxu0
        %v772 = vadd.f32 0.0, %v771
        %773 = vdwg.mxu0
        %v774 = vadd.f32 %v736, %v772
        %775 = vrot.lane.b32.xlu0 %v481, 119
        %v776 = vpop.permute.xlu0 %775
        %778 = vrot.lane.b32.xlu0 %v481, 55
        %v779 = vpop.permute.xlu0 %778
        %vm781 = vcmask 449536
        %v782 = vsel %vm781, %v776, %v779
        %v783 = vsel %vm394, 1, 0
        %vm784 = vcmp.eq.s32.totalorder %v783, 1
        %v785 = vsel %vm784, %v782, 0.0
        %v787 = vsel %vm505, %v407, 0
        %v790 = vsel %vm509, %v785, 0
        %792 = vmatpush.msra.mxu0 0.0
        %793 = vmatpush.msra.mxu0 0.0
        %794 = vmatpush.msra.mxu0 0.0
        %795 = vmatpush.msra.mxu0 0.0
        %796 = vmatpush.msra.mxu0 0.0
        %797 = vmatpush.msra.mxu0 0.0
        %798 = vmatpush.msra.mxu0 0.0
        %799 = vmatpush.msra.mxu0 0.0
        %800 = vmatpush.msra.mxu0 0.0
        %801 = vmatpush.msra.mxu0 0.0
        %802 = vmatpush.msra.mxu0 0.0
        %803 = vmatpush.msra.mxu0 0.0
        %804 = vmatpush.msra.mxu0 0.0
        %805 = vmatpush.msra.mxu0 0.0
        %806 = vmatpush.msra.mxu0 0.0
        %807 = vmatpush.msra.mxu0 %v790
        %808 = vmatmul.f32.gmra.mxu0 %v787
        %v809 = vpop.f32.mrf.mxu0
        %v810 = vadd.f32 0.0, %v809
        %811 = vdwg.mxu0
        %v812 = vadd.f32 %v774, %v810
        %vm813 = vcmask 523264
        %v814 = vsel %vm813, %v812, 0.0
        %815 = vadd.xlane.f32.xlu0 %v814
        %v816 = vpop.xlane.xlu0 %815
        %v817 = vmul.f32 %v816, 0.015625
        %v818 = vmul.f32 %v812, %v812
        %v819 = vsel %vm813, %v818, 0.0
        %820 = vadd.xlane.f32.xlu0 %v819
        %v821 = vpop.xlane.xlu0 %820
        %v822 = vmul.f32 %v821, 0.015625
        %v823 = vmul.f32 %v817, %v817
        %v824 = vsub.f32 %v822, %v823
        %v825 = vmax.f32 %v824, 0.0
        %v826 = vsub.f32 %v812, %v817
        %v827 = vadd.f32 %v825, 1e-05
        %v828 = vrsqrt.pop %v827
        %v829 = vmul.f32 %v828, %v827
        %v830 = vmul.f32 %v829, %v828
        %v831 = vmul.f32 0.5, %v830
        %v832 = vsub.f32 1.5, %v831
        %v833 = vmul.f32 %v828, %v832
        %vm834 = vweird.f32 %v827
        %vm835 = vweird.f32 %v828
        %vm836 = vmor %vm834, %vm835
        %v837 = vsel %vm836, %v828, %v833
        %v838 = vmul.f32 %v826, %v837
        %840 = vset.pattern.permute.xlu0 0
        %841 = vperm.xlu0 %840, %v408
        %v842 = vpop.permute.xlu0 %841
        %v844 = vmul.f32 %v838, %v842
        %846 = vset.pattern.permute.xlu0 0
        %847 = vperm.xlu0 %846, %v409
        %v848 = vpop.permute.xlu0 %847
        %v850 = vadd.f32 %v844, %v848
        %vm851 = vcmp.ge.f32.partialorder %v850, 0.0
        %853 = vset.pattern.permute.xlu0 0
        %854 = vperm.xlu0 %853, %v410
        %v855 = vpop.permute.xlu0 %854
        %v857 = vmul.f32 %v855, %v850
        %v858 = vsel %vm851, %v850, %v857
        %859 = vst.msk [vmem:[%s357] sm:$0xff] %vm813, %v858
        %s860 = scalar_lea.vmem %s369, 8
        %v861 = vld [vmem:[%s860] sm:$0xff]
        %862 = vmatpush.msra.mxu0 0.0
        %863 = vmatpush.msra.mxu0 0.0
        %864 = vmatpush.msra.mxu0 0.0
        %865 = vmatpush.msra.mxu0 0.0
        %866 = vmatpush.msra.mxu0 0.0
        %867 = vmatpush.msra.mxu0 0.0
        %868 = vmatpush.msra.mxu0 0.0
        %869 = vmatpush.msra.mxu0 0.0
        %870 = vmatpush.msra.mxu0 0.0
        %871 = vmatpush.msra.mxu0 0.0
        %872 = vmatpush.msra.mxu0 0.0
        %873 = vmatpush.msra.mxu0 0.0
        %874 = vmatpush.msra.mxu0 0.0
        %875 = vmatpush.msra.mxu0 0.0
        %876 = vmatpush.msra.mxu0 0.0
        %877 = vmatpush.msra.mxu0 %v861
        %878 = vmatmul.f32.gmra.mxu0 %v414
        %v879 = vpop.f32.mrf.mxu0
        %v880 = vadd.f32 0.0, %v879
        %881 = vdwg.mxu0
        %v882 = vsel %vm436, %v880, 0.0
        %883 = vadd.xlane.f32.xlu0 %v882
        %v884 = vpop.xlane.xlu0 %883
        %v885 = vmul.f32 %v884, 0.015625
        %v886 = vmul.f32 %v880, %v880
        %v887 = vsel %vm436, %v886, 0.0
        %888 = vadd.xlane.f32.xlu0 %v887
        %v889 = vpop.xlane.xlu0 %888
        %v890 = vmul.f32 %v889, 0.015625
        %v891 = vmul.f32 %v885, %v885
        %v892 = vsub.f32 %v890, %v891
        %v893 = vmax.f32 %v892, 0.0
        %v894 = vsub.f32 %v880, %v885
        %v895 = vadd.f32 %v893, 1e-05
        %v896 = vrsqrt.pop %v895
        %v897 = vmul.f32 %v896, %v895
        %v898 = vmul.f32 %v897, %v896
        %v899 = vmul.f32 0.5, %v898
        %v900 = vsub.f32 1.5, %v899
        %v901 = vmul.f32 %v896, %v900
        %vm902 = vweird.f32 %v895
        %vm903 = vweird.f32 %v896
        %vm904 = vmor %vm902, %vm903
        %v905 = vsel %vm904, %v896, %v901
        %v906 = vmul.f32 %v894, %v905
        %v907 = vmul.f32 %v906, %v465
        %v908 = vadd.f32 %v907, %v471
        %vm909 = vcmp.ge.f32.partialorder %v908, 0.0
        %v910 = vmul.f32 %v478, %v908
        %v911 = vsel %vm909, %v908, %v910
        %s912 = scalar_lea.vmem %s364, 4 [#allocation4]
        %913 = vst.msk [vmem:[%s912] sm:$0xf] %vm436, %v911
        %915 = vrot.lane.b32.xlu0 %v911, 73
        %v916 = vpop.permute.xlu0 %915
        %918 = vrot.lane.b32.xlu0 %v911, 9
        %v919 = vpop.permute.xlu0 %918
        %v921 = vsel %vm490, %v916, %v919
        %v922 = vsel %vm493, %v921, 0.0
        %923 = vrot.lane.b32.xlu0 %v911, 72
        %v924 = vpop.permute.xlu0 %923
        %926 = vrot.lane.b32.xlu0 %v911, 8
        %v927 = vpop.permute.xlu0 %926
        %v929 = vsel %vm412, %v924, %v927
        %v930 = vsel %vm503, %v929, 0.0
        %v932 = vsel %vm509, %v930, 0
        %934 = vmatpush.msra.mxu0 0.0
        %935 = vmatpush.msra.mxu0 0.0
        %936 = vmatpush.msra.mxu0 0.0
        %937 = vmatpush.msra.mxu0 0.0
        %938 = vmatpush.msra.mxu0 0.0
        %939 = vmatpush.msra.mxu0 0.0
        %940 = vmatpush.msra.mxu0 0.0
        %941 = vmatpush.msra.mxu0 0.0
        %942 = vmatpush.msra.mxu0 0.0
        %943 = vmatpush.msra.mxu0 0.0
        %944 = vmatpush.msra.mxu0 0.0
        %945 = vmatpush.msra.mxu0 0.0
        %946 = vmatpush.msra.mxu0 0.0
        %947 = vmatpush.msra.mxu0 0.0
        %948 = vmatpush.msra.mxu0 0.0
        %949 = vmatpush.msra.mxu0 %v932
        %950 = vmatmul.f32.gmra.mxu0 %v507
        %v951 = vpop.f32.mrf.mxu0
        %v952 = vadd.f32 0.0, %v951
        %953 = vdwg.mxu0
        %v955 = vsel %vm509, %v922, 0
        %957 = vmatpush.msra.mxu0 0.0
        %958 = vmatpush.msra.mxu0 0.0
        %959 = vmatpush.msra.mxu0 0.0
        %960 = vmatpush.msra.mxu0 0.0
        %961 = vmatpush.msra.mxu0 0.0
        %962 = vmatpush.msra.mxu0 0.0
        %963 = vmatpush.msra.mxu0 0.0
        %964 = vmatpush.msra.mxu0 0.0
        %965 = vmatpush.msra.mxu0 0.0
        %966 = vmatpush.msra.mxu0 0.0
        %967 = vmatpush.msra.mxu0 0.0
        %968 = vmatpush.msra.mxu0 0.0
        %969 = vmatpush.msra.mxu0 0.0
        %970 = vmatpush.msra.mxu0 0.0
        %971 = vmatpush.msra.mxu0 0.0
        %972 = vmatpush.msra.mxu0 %v955
        %973 = vmatmul.f32.gmra.mxu0 %v534
        %v974 = vpop.f32.mrf.mxu0
        %v975 = vadd.f32 %v952, %v974
        %976 = vdwg.mxu0
        %977 = vrot.lane.b32.xlu0 %v911, 71
        %v978 = vpop.permute.xlu0 %977
        %980 = vrot.lane.b32.xlu0 %v911, 7
        %v981 = vpop.permute.xlu0 %980
        %v983 = vsel %vm565, %v978, %v981
        %v984 = vsel %vm568, %v983, 0.0
        %v986 = vsel %vm509, %v984, 0
        %988 = vmatpush.msra.mxu0 0.0
        %989 = vmatpush.msra.mxu0 0.0
        %990 = vmatpush.msra.mxu0 0.0
        %991 = vmatpush.msra.mxu0 0.0
        %992 = vmatpush.msra.mxu0 0.0
        %993 = vmatpush.msra.mxu0 0.0
        %994 = vmatpush.msra.mxu0 0.0
        %995 = vmatpush.msra.mxu0 0.0
        %996 = vmatpush.msra.mxu0 0.0
        %997 = vmatpush.msra.mxu0 0.0
        %998 = vmatpush.msra.mxu0 0.0
        %999 = vmatpush.msra.mxu0 0.0
        %1000 = vmatpush.msra.mxu0 0.0
        %1001 = vmatpush.msra.mxu0 0.0
        %1002 = vmatpush.msra.mxu0 0.0
        %1003 = vmatpush.msra.mxu0 %v986
        %1004 = vmatmul.f32.gmra.mxu0 %v571
        %v1005 = vpop.f32.mrf.mxu0
        %v1006 = vadd.f32 0.0, %v1005
        %1007 = vdwg.mxu0
        %v1008 = vadd.f32 %v975, %v1006
        %1009 = vrot.lane.b32.xlu0 %v911, 65
        %v1010 = vpop.permute.xlu0 %1009
        %1012 = vrot.lane.b32.xlu0 %v911, 1
        %v1013 = vpop.permute.xlu0 %1012
        %v1015 = vsel %vm603, %v1010, %v1013
        %v1016 = vsel %vm606, %v1015, 0.0
        %v1018 = vsel %vm509, %v1016, 0
        %1020 = vmatpush.msra.mxu0 0.0
        %1021 = vmatpush.msra.mxu0 0.0
        %1022 = vmatpush.msra.mxu0 0.0
        %1023 = vmatpush.msra.mxu0 0.0
        %1024 = vmatpush.msra.mxu0 0.0
        %1025 = vmatpush.msra.mxu0 0.0
        %1026 = vmatpush.msra.mxu0 0.0
        %1027 = vmatpush.msra.mxu0 0.0
        %1028 = vmatpush.msra.mxu0 0.0
        %1029 = vmatpush.msra.mxu0 0.0
        %1030 = vmatpush.msra.mxu0 0.0
        %1031 = vmatpush.msra.mxu0 0.0
        %1032 = vmatpush.msra.mxu0 0.0
        %1033 = vmatpush.msra.mxu0 0.0
        %1034 = vmatpush.msra.mxu0 0.0
        %1035 = vmatpush.msra.mxu0 %v1018
        %1036 = vmatmul.f32.gmra.mxu0 %v609
        %v1037 = vpop.f32.mrf.mxu0
        %v1038 = vadd.f32 0.0, %v1037
        %1039 = vdwg.mxu0
        %v1040 = vadd.f32 %v1008, %v1038
        %v1041 = vsel %vm509, %v911, 0
        %1043 = vmatpush.msra.mxu0 0.0
        %1044 = vmatpush.msra.mxu0 0.0
        %1045 = vmatpush.msra.mxu0 0.0
        %1046 = vmatpush.msra.mxu0 0.0
        %1047 = vmatpush.msra.mxu0 0.0
        %1048 = vmatpush.msra.mxu0 0.0
        %1049 = vmatpush.msra.mxu0 0.0
        %1050 = vmatpush.msra.mxu0 0.0
        %1051 = vmatpush.msra.mxu0 0.0
        %1052 = vmatpush.msra.mxu0 0.0
        %1053 = vmatpush.msra.mxu0 0.0
        %1054 = vmatpush.msra.mxu0 0.0
        %1055 = vmatpush.msra.mxu0 0.0
        %1056 = vmatpush.msra.mxu0 0.0
        %1057 = vmatpush.msra.mxu0 0.0
        %1058 = vmatpush.msra.mxu0 %v1041
        %1059 = vmatmul.f32.gmra.mxu0 %v636
        %v1060 = vpop.f32.mrf.mxu0
        %v1061 = vadd.f32 0.0, %v1060
        %1062 = vdwg.mxu0
        %v1063 = vadd.f32 %v1040, %v1061
        %1064 = vrot.lane.b32.xlu0 %v911, 127
        %v1065 = vpop.permute.xlu0 %1064
        %1067 = vrot.lane.b32.xlu0 %v911, 63
        %v1068 = vpop.permute.xlu0 %1067
        %v1070 = vsel %vm667, %v1065, %v1068
        %v1071 = vsel %vm670, %v1070, 0.0
        %v1073 = vsel %vm509, %v1071, 0
        %1075 = vmatpush.msra.mxu0 0.0
        %1076 = vmatpush.msra.mxu0 0.0
        %1077 = vmatpush.msra.mxu0 0.0
        %1078 = vmatpush.msra.mxu0 0.0
        %1079 = vmatpush.msra.mxu0 0.0
        %1080 = vmatpush.msra.mxu0 0.0
        %1081 = vmatpush.msra.mxu0 0.0
        %1082 = vmatpush.msra.mxu0 0.0
        %1083 = vmatpush.msra.mxu0 0.0
        %1084 = vmatpush.msra.mxu0 0.0
        %1085 = vmatpush.msra.mxu0 0.0
        %1086 = vmatpush.msra.mxu0 0.0
        %1087 = vmatpush.msra.mxu0 0.0
        %1088 = vmatpush.msra.mxu0 0.0
        %1089 = vmatpush.msra.mxu0 0.0
        %1090 = vmatpush.msra.mxu0 %v1073
        %1091 = vmatmul.f32.gmra.mxu0 %v673
        %v1092 = vpop.f32.mrf.mxu0
        %v1093 = vadd.f32 0.0, %v1092
        %1094 = vdwg.mxu0
        %v1095 = vadd.f32 %v1063, %v1093
        %1096 = vrot.lane.b32.xlu0 %v911, 121
        %v1097 = vpop.permute.xlu0 %1096
        %1099 = vrot.lane.b32.xlu0 %v911, 57
        %v1100 = vpop.permute.xlu0 %1099
        %v1102 = vsel %vm705, %v1097, %v1100
        %v1103 = vsel %vm708, %v1102, 0.0
        %v1105 = vsel %vm509, %v1103, 0
        %1107 = vmatpush.msra.mxu0 0.0
        %1108 = vmatpush.msra.mxu0 0.0
        %1109 = vmatpush.msra.mxu0 0.0
        %1110 = vmatpush.msra.mxu0 0.0
        %1111 = vmatpush.msra.mxu0 0.0
        %1112 = vmatpush.msra.mxu0 0.0
        %1113 = vmatpush.msra.mxu0 0.0
        %1114 = vmatpush.msra.mxu0 0.0
        %1115 = vmatpush.msra.mxu0 0.0
        %1116 = vmatpush.msra.mxu0 0.0
        %1117 = vmatpush.msra.mxu0 0.0
        %1118 = vmatpush.msra.mxu0 0.0
        %1119 = vmatpush.msra.mxu0 0.0
        %1120 = vmatpush.msra.mxu0 0.0
        %1121 = vmatpush.msra.mxu0 0.0
        %1122 = vmatpush.msra.mxu0 %v1105
        %1123 = vmatmul.f32.gmra.mxu0 %v711
        %v1124 = vpop.f32.mrf.mxu0
        %v1125 = vadd.f32 0.0, %v1124
        %1126 = vdwg.mxu0
        %v1127 = vadd.f32 %v1095, %v1125
        %1128 = vrot.lane.b32.xlu0 %v911, 120
        %v1129 = vpop.permute.xlu0 %1128
        %1131 = vrot.lane.b32.xlu0 %v911, 56
        %v1132 = vpop.permute.xlu0 %1131
        %v1134 = vsel %vm743, %v1129, %v1132
        %v1135 = vsel %vm746, %v1134, 0.0
        %v1137 = vsel %vm509, %v1135, 0
        %1139 = vmatpush.msra.mxu0 0.0
        %1140 = vmatpush.msra.mxu0 0.0
        %1141 = vmatpush.msra.mxu0 0.0
        %1142 = vmatpush.msra.mxu0 0.0
        %1143 = vmatpush.msra.mxu0 0.0
        %1144 = vmatpush.msra.mxu0 0.0
        %1145 = vmatpush.msra.mxu0 0.0
        %1146 = vmatpush.msra.mxu0 0.0
        %1147 = vmatpush.msra.mxu0 0.0
        %1148 = vmatpush.msra.mxu0 0.0
        %1149 = vmatpush.msra.mxu0 0.0
        %1150 = vmatpush.msra.mxu0 0.0
        %1151 = vmatpush.msra.mxu0 0.0
        %1152 = vmatpush.msra.mxu0 0.0
        %1153 = vmatpush.msra.mxu0 0.0
        %1154 = vmatpush.msra.mxu0 %v1137
        %1155 = vmatmul.f32.gmra.mxu0 %v749
        %v1156 = vpop.f32.mrf.mxu0
        %v1157 = vadd.f32 0.0, %v1156
        %1158 = vdwg.mxu0
        %v1159 = vadd.f32 %v1127, %v1157
        %1160 = vrot.lane.b32.xlu0 %v911, 119
        %v1161 = vpop.permute.xlu0 %1160
        %1163 = vrot.lane.b32.xlu0 %v911, 55
        %v1164 = vpop.permute.xlu0 %1163
        %v1166 = vsel %vm781, %v1161, %v1164
        %v1167 = vsel %vm784, %v1166, 0.0
        %v1169 = vsel %vm509, %v1167, 0
        %1171 = vmatpush.msra.mxu0 0.0
        %1172 = vmatpush.msra.mxu0 0.0
        %1173 = vmatpush.msra.mxu0 0.0
        %1174 = vmatpush.msra.mxu0 0.0
        %1175 = vmatpush.msra.mxu0 0.0
        %1176 = vmatpush.msra.mxu0 0.0
        %1177 = vmatpush.msra.mxu0 0.0
        %1178 = vmatpush.msra.mxu0 0.0
        %1179 = vmatpush.msra.mxu0 0.0
        %1180 = vmatpush.msra.mxu0 0.0
        %1181 = vmatpush.msra.mxu0 0.0
        %1182 = vmatpush.msra.mxu0 0.0
        %1183 = vmatpush.msra.mxu0 0.0
        %1184 = vmatpush.msra.mxu0 0.0
        %1185 = vmatpush.msra.mxu0 0.0
        %1186 = vmatpush.msra.mxu0 %v1169
        %1187 = vmatmul.f32.gmra.mxu0 %v787
        %v1188 = vpop.f32.mrf.mxu0
        %v1189 = vadd.f32 0.0, %v1188
        %1190 = vdwg.mxu0
        %v1191 = vadd.f32 %v1159, %v1189
        %v1192 = vsel %vm813, %v1191, 0.0
        %1193 = vadd.xlane.f32.xlu0 %v1192
        %v1194 = vpop.xlane.xlu0 %1193
        %v1195 = vmul.f32 %v1194, 0.015625
        %v1196 = vmul.f32 %v1191, %v1191
        %v1197 = vsel %vm813, %v1196, 0.0
        %1198 = vadd.xlane.f32.xlu0 %v1197
        %v1199 = vpop.xlane.xlu0 %1198
        %v1200 = vmul.f32 %v1199, 0.015625
        %v1201 = vmul.f32 %v1195, %v1195
        %v1202 = vsub.f32 %v1200, %v1201
        %v1203 = vmax.f32 %v1202, 0.0
        %v1204 = vsub.f32 %v1191, %v1195
        %v1205 = vadd.f32 %v1203, 1e-05
        %v1206 = vrsqrt.pop %v1205
        %v1207 = vmul.f32 %v1206, %v1205
        %v1208 = vmul.f32 %v1207, %v1206
        %v1209 = vmul.f32 0.5, %v1208
        %v1210 = vsub.f32 1.5, %v1209
        %v1211 = vmul.f32 %v1206, %v1210
        %vm1212 = vweird.f32 %v1205
        %vm1213 = vweird.f32 %v1206
        %vm1214 = vmor %vm1212, %vm1213
        %v1215 = vsel %vm1214, %v1206, %v1211
        %v1216 = vmul.f32 %v1204, %v1215
        %v1217 = vmul.f32 %v1216, %v842
        %v1218 = vadd.f32 %v1217, %v848
        %vm1219 = vcmp.ge.f32.partialorder %v1218, 0.0
        %v1220 = vmul.f32 %v855, %v1218
        %v1221 = vsel %vm1219, %v1218, %v1220
        %s1222 = scalar_lea.vmem %s357, 8 [#allocation2]
        %1223 = vst.msk [vmem:[%s1222] sm:$0xff] %vm813, %v1221
        %s1224 = sand.u32 %s230, 1
        %s1225 = scalar_lea.sflag [#allocation3], %s1224
        %s1226 = sand.u32 %s230, 1
        %s1227 = smul.addr %s1226, 16
        %s1228 = scalar_lea.vmem [#allocation2], %s1227
        %s1229 = sand.u32 %s256, 1
        %s1230 = scalar_lea.sflag [#allocation5], %s1229
        %s1231 = sand.u32 %s256, 1
        %s1232 = smul.addr %s1231, 8
        %s1233 = scalar_lea.vmem [#allocation4], %s1232
        // Predicated region
        $region57: #{tpu_custom_call.1} parent=55 // pred_check
          %p1234 = pneg %p240
        $region58: #{tpu_custom_call.1} parent=55 // pred_check_branch
          %1236 = sbr.rel (%p1234) target = $region60
        $region59: #{tpu_custom_call.1} parent=55 // pred_region
          %s1237 = smul.u32 2, %s28
          %1239 = vsyncadd %s1225, 0
          %s1240 = smul.addr %s1237, 8
          %s1241 = scalar_lea.hbm %s9, %s1240
          %s1242 = sshll.u32 %s1228, 4
          %s1243 = int_to_ptr.vmem [resolvable:$true] %s1242
          %s1244 = sshll.u32 %s1241, 4
          %s1245 = int_to_ptr.hbm [resolvable:$true] %s1244
          %1250 = dma.vmem_to_hbm [thread:$0]  %s1243, 256, %s1245, %s1225, 128, 128, 8
        $region60: #{tpu_custom_call.1} parent=55 // pred_fallthru
          _
        // Predicated region
        $region61: #{tpu_custom_call.1} parent=55 // pred_check
          %p1251 = pneg %p266
        $region62: #{tpu_custom_call.1} parent=55 // pred_check_branch
          %1253 = sbr.rel (%p1251) target = $region64
        $region63: #{tpu_custom_call.1} parent=55 // pred_region
          %s1254 = smul.u32 2, %s28
          %1256 = vsyncadd %s1230, 0
          %s1257 = smul.addr %s1254, 4
          %s1258 = scalar_lea.hbm %s10, %s1257
          %s1259 = sshll.u32 %s1233, 4
          %s1260 = int_to_ptr.vmem [resolvable:$true] %s1259
          %s1261 = sshll.u32 %s1258, 4
          %s1262 = int_to_ptr.hbm [resolvable:$true] %s1261
          %1267 = dma.vmem_to_hbm [thread:$0]  %s1260, 128, %s1262, %s1230, 64, 64, 4
        $region64: #{tpu_custom_call.1} parent=55 // pred_fallthru
          _
      $region56: #{tpu_custom_call.1} parent=5 // pred_fallthru
        _
      %p1268 = scmp.le.s32.totalorder 2, %s23
      // Predicated region
      $region65: #{tpu_custom_call.1} parent=5 // pred_check
        %p1269 = pneg %p1268
      $region66: #{tpu_custom_call.1} parent=5 // pred_check_branch
        %1271 = sbr.rel (%p1269) target = $region68
      $region67: #{tpu_custom_call.1} parent=5 // pred_region
        %s1272 = ssub.s32 %s23, 2
        // Predicated region
        $region69: #{tpu_custom_call.1} parent=67 // pred_check
          %p1273 = pneg %p246
        $region70: #{tpu_custom_call.1} parent=67 // pred_check_branch
          %1275 = sbr.rel (%p1273) target = $region72
        $region71: #{tpu_custom_call.1} parent=67 // pred_region
          %s1276 = sand.u32 %s231, 1
          %s1277 = scalar_lea.sflag [#allocation3], %s1276
          %s1278 = sand.u32 %s231, 1
          %s1279 = smul.addr %s1278, 16
          %s1280 = scalar_lea.vmem [#allocation2], %s1279
          %1282 = dma.done %s1277, 256
        $region72: #{tpu_custom_call.1} parent=67 // pred_fallthru
          _
        // Predicated region
        $region73: #{tpu_custom_call.1} parent=67 // pred_check
          %p1283 = pneg %p272
        $region74: #{tpu_custom_call.1} parent=67 // pred_check_branch
          %1285 = sbr.rel (%p1283) target = $region76
        $region75: #{tpu_custom_call.1} parent=67 // pred_region
          %s1286 = sand.u32 %s257, 1
          %s1287 = scalar_lea.sflag [#allocation5], %s1286
          %s1288 = sand.u32 %s257, 1
          %s1289 = smul.addr %s1288, 8
          %s1290 = scalar_lea.vmem [#allocation4], %s1289
          %1292 = dma.done %s1287, 128
        $region76: #{tpu_custom_call.1} parent=67 // pred_fallthru
          _
      $region68: #{tpu_custom_call.1} parent=5 // pred_fallthru
        _
    $region6: #{tpu_custom_call.1} parent=1 // loop_footer
      %s27 = sadd.s32 1, %s23
    $region7: #{tpu_custom_call.1} parent=1 // loop_footer_branch
      %22 = sbr.rel target = $region3
    $region8: #{tpu_custom_call.1} parent=1 // loop_exit
      _
    %1293 = vsyncpa [#allocation3], 1
    %s1294 = scalar_lea.sflag [#allocation3], 1
    %1295 = vsyncpa %s1294, 1
    %1296 = vsyncpa [#allocation5], 1
    %s1297 = scalar_lea.sflag [#allocation5], 1
    %1298 = vsyncpa %s1297, 1

</llo_original>
